<compile_context>
chip_gen: v5e
topology: v5e:2x2
jax: 0.10.0
libtpu: 0.0.40
codegen_flags: <defaults>
</compile_context>

<pallas_src>
import math
import functools

import jax
import jax.numpy as jnp
from jax.experimental import pallas as pl
from jax.experimental.pallas import tpu as pltpu


def _round_up(x, m):
    return ((x + m - 1) // m) * m


# ------------------------------- kernel ------------------------------------ #
def _block_kernel(x_ref,
                  ln1_g_ref, ln1_b_ref,
                  wq_ref, bq_ref, wk_ref, bk_ref, wv_ref, bv_ref,
                  wo_ref, bo_ref,
                  ln2_g_ref, ln2_b_ref,
                  wfc_ref, bfc_ref, wproj_ref, bproj_ref,
                  out_ref, attn_ref,
                  h1_scr, k_scr, v_scr, q_scr, aout_scr,
                  *, n_head: int, seq_len: int, compute_dtype):
    Lp, D = h1_scr.shape          # padded sequence length, model dim
    TQ = q_scr.shape[0]           # query-row tile
    nQ = Lp // TQ
    hd = D // n_head
    cdt = compute_dtype
    inv_h = 1.0 / n_head

    def layernorm(v, g_ref, b_ref):
        # fp32 LayerNorm (matches the LayerNorm subclass that upcasts to f32).
        v32 = v.astype(jnp.float32)
        mu = jnp.mean(v32, axis=-1, keepdims=True)
        var = jnp.mean((v32 - mu) ** 2, axis=-1, keepdims=True)
        return (v32 - mu) * jax.lax.rsqrt(var + 1e-5) * g_ref[...] + b_ref[...]

    # ---- once per batch element (first q tile): LN(x), K, V -> VMEM cache ---- #
    @pl.when(pl.program_id(1) == 0)
    def _():
        @pl.loop(0, nQ)                      # chunked: bounds live values to (TQ, D)
        def _(c):
            rows = pl.ds(pl.multiple_of(c * TQ, TQ), TQ)
            h1 = layernorm(x_ref[rows, :], ln1_g_ref, ln1_b_ref).astype(cdt)
            h1_scr[rows, :] = h1
            k_scr[rows, :] = (jnp.dot(h1, wk_ref[...],
                                      preferred_element_type=jnp.float32)
                              + bk_ref[...]).astype(cdt)
            v_scr[rows, :] = (jnp.dot(h1, wv_ref[...],
                                      preferred_element_type=jnp.float32)
                              + bv_ref[...]).astype(cdt)

    # ---------------- per query-row tile ---------------- #
    qrows = pl.ds(pl.multiple_of(pl.program_id(1) * TQ, TQ), TQ)
    # 1/sqrt(hd) is folded into wq / bq by prepare_params().
    q_scr[...] = (jnp.dot(h1_scr[qrows, :], wq_ref[...],
                          preferred_element_type=jnp.float32)
                  + bq_ref[...]).astype(cdt)

    key_valid = None
    if Lp != seq_len:                         # static: only when padding exists
        key_valid = jax.lax.broadcasted_iota(jnp.int32, (1, Lp), 1) < seq_len

    for h in range(n_head):                   # static, small H
        hs = h * hd
        # scores: contract last dims directly (no in-kernel transpose).
        s = jax.lax.dot_general(q_scr[:, hs:hs + hd], k_scr[:, hs:hs + hd],
                                (((1,), (1,)), ((), ())),
                                preferred_element_type=jnp.float32)   # (TQ, Lp)
        if key_valid is not None:
            s = jnp.where(key_valid, s, -1e30)
        s = s - jnp.max(s, axis=-1, keepdims=True)
        e = jnp.exp(s)
        # exact reciprocal: emitted attention weights are checked to 1e-5.
        p = e * pl.reciprocal(jnp.sum(e, axis=-1, keepdims=True), approx=False)

        # head-averaged attention probs: assign on h==0, accumulate after,
        # fold 1/n_head into the last accumulation (no zero-fill, no scratch).
        acc = p if h == 0 else attn_ref[...] + p
        attn_ref[...] = ((acc * inv_h) if h == n_head - 1 else acc
                         ).astype(attn_ref.dtype)

        # fused output projection: every store is lane-dense (width D).
        ho = jnp.dot(p.astype(cdt), v_scr[:, hs:hs + hd],
                     preferred_element_type=jnp.float32)              # (TQ, hd)
        contrib = jnp.dot(ho.astype(cdt), wo_ref[hs:hs + hd, :],
                          preferred_element_type=jnp.float32)         # (TQ, D)
        if h == 0:
            aout_scr[...] = contrib
        else:
            aout_scr[...] += contrib

    # residual 1 (+ out-proj bias added once, not per head)
    x1 = x_ref[qrows, :].astype(jnp.float32) + aout_scr[...] + bo_ref[...]

    # ---------------- MLP branch ---------------- #
    h2 = layernorm(x1, ln2_g_ref, ln2_b_ref).astype(cdt)
    fc = jnp.dot(h2, wfc_ref[...],
                 preferred_element_type=jnp.float32) + bfc_ref[...]    # (TQ, 4D)
    fc = fc * jax.nn.sigmoid(1.702 * fc)                               # QuickGELU (f32, EUP)
    proj = jnp.dot(fc.astype(cdt), wproj_ref[...],
                   preferred_element_type=jnp.float32) + bproj_ref[...]

    out_ref[...] = (x1 + proj).astype(out_ref.dtype)                   # residual 2


# --------------------------- parameter prep -------------------------------- #
def prepare_params(params, n_head, compute_dtype=jnp.float32):
    """One-time weight prep (pre-transpose, fold the 1/sqrt(hd) q-scale, cast).

    Call once at parameter-init time (or jit+cache it) so the transposes and
    casts are NOT re-executed on every forward call.
    compute_dtype: MXU operand dtype (accumulation is always f32).  bf16 is the
    fast path on v5e/v6e/v7x.
    """
    D = params["w_out"].shape[0]
    assert D % n_head == 0, "d_model must be divisible by n_head"
    hd = D // n_head
    scale = 1.0 / math.sqrt(hd)
    cdt = compute_dtype
    f32 = jnp.float32
    p = params
    b_qkv = p["b_qkv"].reshape(1, 3 * D)
    return dict(
        compute_dtype=cdt,
        ln1_g=p["ln1_g"].reshape(1, D).astype(f32),
        ln1_b=p["ln1_b"].reshape(1, D).astype(f32),
        wq=(p["w_qkv"][0 * D:1 * D, :].T * scale).astype(cdt),   # (D, D), scale folded
        bq=(b_qkv[:, 0 * D:1 * D] * scale).astype(f32),          # (1, D), scale folded
        wk=p["w_qkv"][1 * D:2 * D, :].T.astype(cdt),             # (D, D)
        bk=b_qkv[:, 1 * D:2 * D].astype(f32),
        wv=p["w_qkv"][2 * D:3 * D, :].T.astype(cdt),             # (D, D)
        bv=b_qkv[:, 2 * D:3 * D].astype(f32),
        wo=p["w_out"].T.astype(cdt),                             # (D, D)
        bo=p["b_out"].reshape(1, D).astype(f32),
        ln2_g=p["ln2_g"].reshape(1, D).astype(f32),
        ln2_b=p["ln2_b"].reshape(1, D).astype(f32),
        wfc=p["w_fc"].T.astype(cdt),                             # (D, 4D)
        bfc=p["b_fc"].reshape(1, 4 * D).astype(f32),
        wproj=p["w_proj"].T.astype(cdt),                         # (4D, D)
        bproj=p["b_proj"].reshape(1, D).astype(f32),
    )


def _pick_vmem_limit_bytes():
    # Per-generation VMEM budget: ~3/4 of physical (v5e/v6e 128 MiB -> 96 MiB,
    # v7x 64 MiB -> 48 MiB).  Conservative fallback if the query is unavailable.
    cap = 64 * 1024 * 1024
    try:
        info = pltpu.get_tpu_info()
        cap = int(getattr(info, "vmem_capacity_bytes", cap)) or cap
    except Exception:
        pass
    return int(min(cap * 3 // 4, 100 * 1024 * 1024))


# ------------------------------- wrapper ------------------------------------ #
def residual_self_attention_block_v2(x_lbd, prepared, n_head, *, tq=None):
    """Forward pass.  x_lbd: (L, B, D) -- same layout as the PyTorch module.

    prepared: output of prepare_params().
    tq: query-row tile.  Default 256 fills the 256-wide v6e/v7x MXU; use 128 on
    v5e (128x128 MXU).
    Returns (out (L, B, D), attn_weights (B, L, L) averaged over heads).
    """
    L, B, D = x_lbd.shape
    cdt = prepared["compute_dtype"]

    if tq is None:
        tq = 256
    TQ = min(_round_up(tq, 8), _round_up(L, 8))
    Lp = _round_up(L, TQ)               # pad L (never fall back to TQ = L)
    nQ = Lp // TQ

    x_bld = jnp.transpose(x_lbd, (1, 0, 2))            # (B, L, D)
    if Lp != L:
        x_bld = jnp.pad(x_bld, ((0, 0), (0, Lp - L), (0, 0)))

    param_arrays = (prepared["ln1_g"], prepared["ln1_b"],
                    prepared["wq"], prepared["bq"],
                    prepared["wk"], prepared["bk"],
                    prepared["wv"], prepared["bv"],
                    prepared["wo"], prepared["bo"],
                    prepared["ln2_g"], prepared["ln2_b"],
                    prepared["wfc"], prepared["bfc"],
                    prepared["wproj"], prepared["bproj"])

    # Constant-index weights/biases: one resident VMEM copy for the whole
    # kernel (no per-grid-step double-buffering).
    resident = pl.BlockSpec(memory_space=pltpu.MemorySpace.VMEM)

    kernel = functools.partial(_block_kernel, n_head=n_head, seq_len=L,
                               compute_dtype=cdt)

    cost = pl.CostEstimate(
        flops=int(24 * B * Lp * D * D + 4 * B * Lp * Lp * D),
        transcendentals=int(B * Lp * Lp * n_head + 4 * B * Lp * D),
        bytes_accessed=int(2 * B * Lp * D * x_bld.dtype.itemsize
                           + B * Lp * Lp * 4
                           + sum(a.size * a.dtype.itemsize for a in param_arrays)),
    )

    out_bld, attn_bll = pl.pallas_call(
        kernel,
        out_shape=(jax.ShapeDtypeStruct((B, Lp, D), x_lbd.dtype),
                   jax.ShapeDtypeStruct((B, Lp, Lp), jnp.float32)),
        grid_spec=pltpu.PrefetchScalarGridSpec(
            num_scalar_prefetch=0,
            grid=(B, nQ),
            in_specs=[pl.BlockSpec((None, Lp, D), lambda b, q: (b, 0, 0))]
                     + [resident] * len(param_arrays),
            out_specs=[pl.BlockSpec((None, TQ, D), lambda b, q: (b, q, 0)),
                       pl.BlockSpec((None, TQ, Lp), lambda b, q: (b, q, 0))],
            scratch_shapes=[pltpu.VMEM((Lp, D), cdt),          # LN1(x) cache
                            pltpu.VMEM((Lp, D), cdt),          # K cache
                            pltpu.VMEM((Lp, D), cdt),          # V cache
                            pltpu.VMEM((TQ, D), cdt),          # q tile
                            pltpu.VMEM((TQ, D), jnp.float32)]  # attn-out accum
        ),
        compiler_params=pltpu.CompilerParams(
            # K/V scratch carries across the q axis -> it must be "arbitrary";
            # the batch axis stays "parallel" (megacore / v7x dual-TC split).
            dimension_semantics=("parallel", "arbitrary"),
            vmem_limit_bytes=_pick_vmem_limit_bytes()),
        cost_estimate=cost,
    )(x_bld, *param_arrays)

    out = jnp.transpose(out_bld[:, :L, :], (1, 0, 2))   # back to (L, B, D)
    attn = attn_bll[:, :L, :L]
    # TODO(synk): make the (B, L, L) attention-weights output optional for
    # callers that don't need it (it is the dominant HBM writeback term).
    return out, attn


# --------------------------- reference (pure JAX) --------------------------- #
def _reference(x_lbd, params, n_head):
    L, B, D = x_lbd.shape
    hd = D // n_head
    x = jnp.transpose(x_lbd, (1, 0, 2)).astype(jnp.float32)      # (B, L, D)

    def ln(v, g, b):
        mu = jnp.mean(v, -1, keepdims=True)
        var = jnp.mean((v - mu) ** 2, -1, keepdims=True)
        return (v - mu) * jax.lax.rsqrt(var + 1e-5) * g + b

    h1 = ln(x, params["ln1_g"], params["ln1_b"])
    qkv = h1 @ params["w_qkv"].T + params["b_qkv"]
    q, k, v = jnp.split(qkv, 3, axis=-1)
    q = q.reshape(B, L, n_head, hd).transpose(0, 2, 1, 3) / math.sqrt(hd)
    k = k.reshape(B, L, n_head, hd).transpose(0, 2, 1, 3)
    v = v.reshape(B, L, n_head, hd).transpose(0, 2, 1, 3)
    s = jnp.einsum("bhld,bhmd->bhlm", q, k)
    p_ = jax.nn.softmax(s, axis=-1)
    ao = jnp.einsum("bhlm,bhmd->bhld", p_, v).transpose(0, 2, 1, 3).reshape(B, L, D)
    ao = ao @ params["w_out"].T + params["b_out"]
    x1 = x + ao
    h2 = ln(x1, params["ln2_g"], params["ln2_b"])
    fc = h2 @ params["w_fc"].T + params["b_fc"]
    fc = fc * jax.nn.sigmoid(1.702 * fc)
    out = x1 + fc @ params["w_proj"].T + params["b_proj"]
    return jnp.transpose(out, (1, 0, 2)), jnp.mean(p_, axis=1)


# --------------------------------- main ------------------------------------- #
if __name__ == "__main__":
    L, B, D, H = 8, 2, 32, 4        # seq, batch, d_model, n_head
    D_FF = 4 * D

    key = jax.random.PRNGKey(0)
    keys = jax.random.split(key, 10)
    init = lambda k, shape, s=0.02: (s * jax.random.normal(k, shape)).astype(jnp.float32)

    # Parameter shapes mirror the PyTorch module's __init__.
    params = {
        "ln1_g": jnp.ones((1, D), jnp.float32),
        "ln1_b": jnp.zeros((1, D), jnp.float32),
        "w_qkv": init(keys[0], (3 * D, D)),     # MultiheadAttention.in_proj_weight
        "b_qkv": init(keys[1], (1, 3 * D)),     # in_proj_bias
        "w_out": init(keys[2], (D, D)),         # out_proj.weight
        "b_out": init(keys[3], (1, D)),         # out_proj.bias
        "ln2_g": jnp.ones((1, D), jnp.float32),
        "ln2_b": jnp.zeros((1, D), jnp.float32),
        "w_fc":  init(keys[4], (D_FF, D)),      # mlp.c_fc.weight
        "b_fc":  init(keys[5], (1, D_FF)),      # mlp.c_fc.bias
        "w_proj": init(keys[6], (D, D_FF)),     # mlp.c_proj.weight
        "b_proj": init(keys[7], (1, D)),        # mlp.c_proj.bias
    }

    x = jax.random.normal(keys[8], (L, B, D), jnp.float32)
    ref_out, ref_attn = _reference(x, params, H)

    # --- exact-precision path (f32 MXU operands): strict check --- #
    prep_f32 = prepare_params(params, H, compute_dtype=jnp.float32)
    out, attn_w = residual_self_attention_block_v2(x, prep_f32, H)
    out = jax.block_until_ready(out)
    attn_w = jax.block_until_ready(attn_w)
    assert out.shape == (L, B, D) and attn_w.shape == (B, L, L)
    assert jnp.allclose(out, ref_out, atol=1e-4, rtol=1e-4)
    assert jnp.allclose(attn_w, ref_attn, atol=1e-5, rtol=1e-4)

    # --- bf16 MXU-operand path (v5e/v6e/v7x fast path): looser tolerance --- #
    prep_bf16 = prepare_params(params, H, compute_dtype=jnp.bfloat16)
    out_bf, attn_bf = residual_self_attention_block_v2(x, prep_bf16, H)
    out_bf = jax.block_until_ready(out_bf)
    attn_bf = jax.block_until_ready(attn_bf)
    assert jnp.allclose(out_bf, ref_out, atol=3e-2, rtol=3e-2)
    assert jnp.allclose(attn_bf, ref_attn, atol=1e-2, rtol=5e-2)

    # --- multi-tile + padded-sequence path: L not a multiple of the tile and
    #     nQ > 1 -> exercises the cached-K/V "arbitrary" q axis and the
    #     padded-key softmax mask --- #
    L2 = 19
    x2 = jax.random.normal(keys[9], (L2, B, D), jnp.float32)
    ref_out2, ref_attn2 = _reference(x2, params, H)
    out2, attn2 = residual_self_attention_block_v2(x2, prep_f32, H, tq=8)
    out2 = jax.block_until_ready(out2)
    attn2 = jax.block_until_ready(attn2)
    assert out2.shape == (L2, B, D) and attn2.shape == (B, L2, L2)
    assert jnp.allclose(out2, ref_out2, atol=1e-4, rtol=1e-4)
    assert jnp.allclose(attn2, ref_attn2, atol=1e-5, rtol=1e-4)

    print("KERNEL_OK")
</pallas_src>

<mosaic_0001>
module attributes {stable_mosaic.version = 11 : i64} {
  func.func @_block_kernel(%arg0: i32, %arg1: i32, %arg2: memref<1x8x32xf32, #tpu.memory_space<vmem>>, %arg3: memref<1x32xf32, #tpu.memory_space<vmem>>, %arg4: memref<1x32xf32, #tpu.memory_space<vmem>>, %arg5: memref<32x32xf32, #tpu.memory_space<vmem>>, %arg6: memref<1x32xf32, #tpu.memory_space<vmem>>, %arg7: memref<32x32xf32, #tpu.memory_space<vmem>>, %arg8: memref<1x32xf32, #tpu.memory_space<vmem>>, %arg9: memref<32x32xf32, #tpu.memory_space<vmem>>, %arg10: memref<1x32xf32, #tpu.memory_space<vmem>>, %arg11: memref<32x32xf32, #tpu.memory_space<vmem>>, %arg12: memref<1x32xf32, #tpu.memory_space<vmem>>, %arg13: memref<1x32xf32, #tpu.memory_space<vmem>>, %arg14: memref<1x32xf32, #tpu.memory_space<vmem>>, %arg15: memref<32x128xf32, #tpu.memory_space<vmem>>, %arg16: memref<1x128xf32, #tpu.memory_space<vmem>>, %arg17: memref<128x32xf32, #tpu.memory_space<vmem>>, %arg18: memref<1x32xf32, #tpu.memory_space<vmem>>, %arg19: memref<1x8x32xf32, #tpu.memory_space<vmem>>, %arg20: memref<1x8x8xf32, #tpu.memory_space<vmem>>, %arg21: memref<8x32xf32, #tpu.memory_space<vmem>>, %arg22: memref<8x32xf32, #tpu.memory_space<vmem>>, %arg23: memref<8x32xf32, #tpu.memory_space<vmem>>, %arg24: memref<8x32xf32, #tpu.memory_space<vmem>>, %arg25: memref<8x32xf32, #tpu.memory_space<vmem>>) attributes {dimension_semantics = [#tpu.dimension_semantics<parallel>, #tpu.dimension_semantics<arbitrary>], iteration_bounds = array<i64: 2, 1>, scalar_prefetch = 0 : i64, scratch_operands = 5 : i64, tpu.core_type = #tpu.core_type<tc>, window_params = [{transform_indices = @transform_0, window_bounds = array<i64: 1, 8, 32>}, {pipeline_mode = #tpu.pipeline_mode<synchronous>, transform_indices = @transform_1, window_bounds = array<i64: 1, 32>}, {pipeline_mode = #tpu.pipeline_mode<synchronous>, transform_indices = @transform_2, window_bounds = array<i64: 1, 32>}, {pipeline_mode = #tpu.pipeline_mode<synchronous>, transform_indices = @transform_3, window_bounds = array<i64: 32, 32>}, {pipeline_mode = #tpu.pipeline_mode<synchronous>, transform_indices = @transform_4, window_bounds = array<i64: 1, 32>}, {pipeline_mode = #tpu.pipeline_mode<synchronous>, transform_indices = @transform_5, window_bounds = array<i64: 32, 32>}, {pipeline_mode = #tpu.pipeline_mode<synchronous>, transform_indices = @transform_6, window_bounds = array<i64: 1, 32>}, {pipeline_mode = #tpu.pipeline_mode<synchronous>, transform_indices = @transform_7, window_bounds = array<i64: 32, 32>}, {pipeline_mode = #tpu.pipeline_mode<synchronous>, transform_indices = @transform_8, window_bounds = array<i64: 1, 32>}, {pipeline_mode = #tpu.pipeline_mode<synchronous>, transform_indices = @transform_9, window_bounds = array<i64: 32, 32>}, {pipeline_mode = #tpu.pipeline_mode<synchronous>, transform_indices = @transform_10, window_bounds = array<i64: 1, 32>}, {pipeline_mode = #tpu.pipeline_mode<synchronous>, transform_indices = @transform_11, window_bounds = array<i64: 1, 32>}, {pipeline_mode = #tpu.pipeline_mode<synchronous>, transform_indices = @transform_12, window_bounds = array<i64: 1, 32>}, {pipeline_mode = #tpu.pipeline_mode<synchronous>, transform_indices = @transform_13, window_bounds = array<i64: 32, 128>}, {pipeline_mode = #tpu.pipeline_mode<synchronous>, transform_indices = @transform_14, window_bounds = array<i64: 1, 128>}, {pipeline_mode = #tpu.pipeline_mode<synchronous>, transform_indices = @transform_15, window_bounds = array<i64: 128, 32>}, {pipeline_mode = #tpu.pipeline_mode<synchronous>, transform_indices = @transform_16, window_bounds = array<i64: 1, 32>}, {transform_indices = @transform_17, window_bounds = array<i64: 1, 8, 32>}, {transform_indices = @transform_18, window_bounds = array<i64: 1, 8, 8>}]} {
    %c0_i32 = arith.constant 0 : i32
    %0 = arith.cmpi eq, %arg1, %c0_i32 : i32
    %1 = arith.extui %0 : i1 to i32
    %c0_i32_0 = arith.constant 0 : i32
    %2 = arith.cmpi ne, %1, %c0_i32_0 : i32
    scf.if %2 {
      %c0_i32_122 = arith.constant 0 : i32
      %c1_i32 = arith.constant 1 : i32
      %168 = arith.muli %c0_i32_122, %c1_i32 : i32
      %c0_i32_123 = arith.constant 0 : i32
      %169 = arith.addi %c0_i32_123, %168 : i32
      %c8_i32_124 = arith.constant 8 : i32
      %170 = arith.muli %169, %c8_i32_124 : i32
      %171 = tpu.assume_multiple %170, 8 : i32
      %c0_125 = arith.constant 0 : index
      %172 = arith.index_cast %171 : i32 to index
      %c0_126 = arith.constant 0 : index
      %173 = vector.load %arg2[%c0_125, %172, %c0_126] : memref<1x8x32xf32, #tpu.memory_space<vmem>>, vector<1x8x32xf32>
      %174 = vector.shape_cast %173 : vector<1x8x32xf32> to vector<8x32xf32>
      %cst_127 = arith.constant dense<0.000000e+00> : vector<8xf32>
      %175 = vector.multi_reduction <add>, %174, %cst_127 [1] : vector<8x32xf32> to vector<8xf32>
      %176 = vector.shape_cast %175 : vector<8xf32> to vector<8x1xf32>
      %cst_128 = arith.constant 3.200000e+01 : f32
      %177 = vector.broadcast %cst_128 : f32 to vector<8x1xf32>
      %178 = arith.divf %176, %177 : vector<8x1xf32>
      %179 = vector.broadcast %178 : vector<8x1xf32> to vector<8x32xf32>
      %180 = arith.subf %174, %179 : vector<8x32xf32>
      %181 = arith.mulf %180, %180 : vector<8x32xf32>
      %cst_129 = arith.constant dense<0.000000e+00> : vector<8xf32>
      %182 = vector.multi_reduction <add>, %181, %cst_129 [1] : vector<8x32xf32> to vector<8xf32>
      %183 = vector.shape_cast %182 : vector<8xf32> to vector<8x1xf32>
      %cst_130 = arith.constant 3.200000e+01 : f32
      %184 = vector.broadcast %cst_130 : f32 to vector<8x1xf32>
      %185 = arith.divf %183, %184 : vector<8x1xf32>
      %186 = vector.broadcast %178 : vector<8x1xf32> to vector<8x32xf32>
      %187 = arith.subf %174, %186 : vector<8x32xf32>
      %cst_131 = arith.constant 9.99999974E-6 : f32
      %188 = vector.broadcast %cst_131 : f32 to vector<8x1xf32>
      %189 = arith.addf %185, %188 : vector<8x1xf32>
      %190 = math.rsqrt %189 : vector<8x1xf32>
      %191 = vector.broadcast %190 : vector<8x1xf32> to vector<8x32xf32>
      %192 = arith.mulf %187, %191 : vector<8x32xf32>
      %c0_132 = arith.constant 0 : index
      %c0_133 = arith.constant 0 : index
      %193 = vector.load %arg3[%c0_132, %c0_133] : memref<1x32xf32, #tpu.memory_space<vmem>>, vector<1x32xf32>
      %194 = vector.broadcast %193 : vector<1x32xf32> to vector<8x32xf32>
      %195 = arith.mulf %192, %194 : vector<8x32xf32>
      %c0_134 = arith.constant 0 : index
      %c0_135 = arith.constant 0 : index
      %196 = vector.load %arg4[%c0_134, %c0_135] : memref<1x32xf32, #tpu.memory_space<vmem>>, vector<1x32xf32>
      %197 = vector.broadcast %196 : vector<1x32xf32> to vector<8x32xf32>
      %198 = arith.addf %195, %197 : vector<8x32xf32>
      %199 = arith.index_cast %171 : i32 to index
      %c0_136 = arith.constant 0 : index
      %200 = vector.load %arg21[%199, %c0_136] : memref<8x32xf32, #tpu.memory_space<vmem>>, vector<8x32xf32>
      tpu.vector_store %arg21[%199, %c0_136], %198 {strides = array<i32>} : memref<8x32xf32, #tpu.memory_space<vmem>>, vector<8x32xf32>,
      %c0_137 = arith.constant 0 : index
      %c0_138 = arith.constant 0 : index
      %201 = vector.load %arg7[%c0_137, %c0_138] : memref<32x32xf32, #tpu.memory_space<vmem>>, vector<32x32xf32>
      %cst_139 = arith.constant dense<0.000000e+00> : vector<8x32xf32>
      %202 = tpu.matmul %198, %201, %cst_139 {dimension_numbers = #tpu.dot_dimension_numbers<[1], [0], [0], [1], [0, 0, 1, 1], [], []>} : vector<8x32xf32>, vector<32x32xf32>, vector<8x32xf32> -> vector<8x32xf32>
      %c0_140 = arith.constant 0 : index
      %c0_141 = arith.constant 0 : index
      %203 = vector.load %arg8[%c0_140, %c0_141] : memref<1x32xf32, #tpu.memory_space<vmem>>, vector<1x32xf32>
      %204 = vector.broadcast %203 : vector<1x32xf32> to vector<8x32xf32>
      %205 = arith.addf %202, %204 : vector<8x32xf32>
      %206 = arith.index_cast %171 : i32 to index
      %c0_142 = arith.constant 0 : index
      %207 = vector.load %arg22[%206, %c0_142] : memref<8x32xf32, #tpu.memory_space<vmem>>, vector<8x32xf32>
      tpu.vector_store %arg22[%206, %c0_142], %205 {strides = array<i32>} : memref<8x32xf32, #tpu.memory_space<vmem>>, vector<8x32xf32>,
      %c0_143 = arith.constant 0 : index
      %c0_144 = arith.constant 0 : index
      %208 = vector.load %arg9[%c0_143, %c0_144] : memref<32x32xf32, #tpu.memory_space<vmem>>, vector<32x32xf32>
      %cst_145 = arith.constant dense<0.000000e+00> : vector<8x32xf32>
      %209 = tpu.matmul %198, %208, %cst_145 {dimension_numbers = #tpu.dot_dimension_numbers<[1], [0], [0], [1], [0, 0, 1, 1], [], []>} : vector<8x32xf32>, vector<32x32xf32>, vector<8x32xf32> -> vector<8x32xf32>
      %c0_146 = arith.constant 0 : index
      %c0_147 = arith.constant 0 : index
      %210 = vector.load %arg10[%c0_146, %c0_147] : memref<1x32xf32, #tpu.memory_space<vmem>>, vector<1x32xf32>
      %211 = vector.broadcast %210 : vector<1x32xf32> to vector<8x32xf32>
      %212 = arith.addf %209, %211 : vector<8x32xf32>
      %213 = arith.index_cast %171 : i32 to index
      %c0_148 = arith.constant 0 : index
      %214 = vector.load %arg23[%213, %c0_148] : memref<8x32xf32, #tpu.memory_space<vmem>>, vector<8x32xf32>
      tpu.vector_store %arg23[%213, %c0_148], %212 {strides = array<i32>} : memref<8x32xf32, #tpu.memory_space<vmem>>, vector<8x32xf32>,
      %c1_i32_149 = arith.constant 1 : i32
    } else {
    }
    %c8_i32 = arith.constant 8 : i32
    %3 = arith.muli %arg1, %c8_i32 : i32
    %4 = tpu.assume_multiple %3, 8 : i32
    %5 = arith.index_cast %4 : i32 to index
    %c0 = arith.constant 0 : index
    %6 = vector.load %arg21[%5, %c0] : memref<8x32xf32, #tpu.memory_space<vmem>>, vector<8x32xf32>
    %c0_1 = arith.constant 0 : index
    %c0_2 = arith.constant 0 : index
    %7 = vector.load %arg5[%c0_1, %c0_2] : memref<32x32xf32, #tpu.memory_space<vmem>>, vector<32x32xf32>
    %cst = arith.constant dense<0.000000e+00> : vector<8x32xf32>
    %8 = tpu.matmul %6, %7, %cst {dimension_numbers = #tpu.dot_dimension_numbers<[1], [0], [0], [1], [0, 0, 1, 1], [], []>} : vector<8x32xf32>, vector<32x32xf32>, vector<8x32xf32> -> vector<8x32xf32>
    %c0_3 = arith.constant 0 : index
    %c0_4 = arith.constant 0 : index
    %9 = vector.load %arg6[%c0_3, %c0_4] : memref<1x32xf32, #tpu.memory_space<vmem>>, vector<1x32xf32>
    %10 = vector.broadcast %9 : vector<1x32xf32> to vector<8x32xf32>
    %11 = arith.addf %8, %10 : vector<8x32xf32>
    %c0_5 = arith.constant 0 : index
    %c0_6 = arith.constant 0 : index
    %12 = vector.load %arg24[%c0_5, %c0_6] : memref<8x32xf32, #tpu.memory_space<vmem>>, vector<8x32xf32>
    tpu.vector_store %arg24[%c0_5, %c0_6], %11 {strides = array<i32>} : memref<8x32xf32, #tpu.memory_space<vmem>>, vector<8x32xf32>,
    %c0_7 = arith.constant 0 : index
    %c0_8 = arith.constant 0 : index
    %13 = vector.load %arg24[%c0_7, %c0_8] : memref<8x32xf32, #tpu.memory_space<vmem>>, vector<8x8xf32>
    %c0_9 = arith.constant 0 : index
    %c0_10 = arith.constant 0 : index
    %14 = vector.load %arg22[%c0_9, %c0_10] : memref<8x32xf32, #tpu.memory_space<vmem>>, vector<8x8xf32>
    %cst_11 = arith.constant dense<0.000000e+00> : vector<8x8xf32>
    %15 = tpu.matmul %13, %14, %cst_11 {dimension_numbers = #tpu.dot_dimension_numbers<[1], [1], [0], [0], [0, 0, 1, 0], [], []>} : vector<8x8xf32>, vector<8x8xf32>, vector<8x8xf32> -> vector<8x8xf32>
    %cst_12 = arith.constant dense<0xFF800000> : vector<8xf32>
    %16 = vector.multi_reduction <maximumf>, %15, %cst_12 [1] : vector<8x8xf32> to vector<8xf32>
    %17 = vector.shape_cast %16 : vector<8xf32> to vector<8x1xf32>
    %18 = vector.broadcast %17 : vector<8x1xf32> to vector<8x8xf32>
    %19 = arith.subf %15, %18 : vector<8x8xf32>
    %20 = math.exp %19 : vector<8x8xf32>
    %cst_13 = arith.constant dense<0.000000e+00> : vector<8xf32>
    %21 = vector.multi_reduction <add>, %20, %cst_13 [1] : vector<8x8xf32> to vector<8xf32>
    %22 = vector.shape_cast %21 : vector<8xf32> to vector<8x1xf32>
    %23 = tpu.reciprocal %22 : vector<8x1xf32> -> vector<8x1xf32>
    %24 = vector.broadcast %23 : vector<8x1xf32> to vector<8x8xf32>
    %25 = arith.mulf %20, %24 : vector<8x8xf32>
    %c0_14 = arith.constant 0 : index
    %c0_15 = arith.constant 0 : index
    %c0_16 = arith.constant 0 : index
    %26 = vector.load %arg20[%c0_14, %c0_15, %c0_16] : memref<1x8x8xf32, #tpu.memory_space<vmem>>, vector<1x8x8xf32>
    %27 = vector.shape_cast %26 : vector<1x8x8xf32> to vector<8x8xf32>
    %28 = vector.shape_cast %25 : vector<8x8xf32> to vector<1x8x8xf32>
    tpu.vector_store %arg20[%c0_14, %c0_15, %c0_16], %28 {strides = array<i32>} : memref<1x8x8xf32, #tpu.memory_space<vmem>>, vector<1x8x8xf32>,
    %c0_17 = arith.constant 0 : index
    %c0_18 = arith.constant 0 : index
    %29 = vector.load %arg23[%c0_17, %c0_18] : memref<8x32xf32, #tpu.memory_space<vmem>>, vector<8x8xf32>
    %cst_19 = arith.constant dense<0.000000e+00> : vector<8x8xf32>
    %30 = tpu.matmul %25, %29, %cst_19 {dimension_numbers = #tpu.dot_dimension_numbers<[1], [0], [0], [1], [0, 0, 1, 1], [], []>} : vector<8x8xf32>, vector<8x8xf32>, vector<8x8xf32> -> vector<8x8xf32>
    %c0_20 = arith.constant 0 : index
    %c0_21 = arith.constant 0 : index
    %31 = vector.load %arg11[%c0_20, %c0_21] : memref<32x32xf32, #tpu.memory_space<vmem>>, vector<8x32xf32>
    %cst_22 = arith.constant dense<0.000000e+00> : vector<8x32xf32>
    %32 = tpu.matmul %30, %31, %cst_22 {dimension_numbers = #tpu.dot_dimension_numbers<[1], [0], [0], [1], [0, 0, 1, 1], [], []>} : vector<8x8xf32>, vector<8x32xf32>, vector<8x32xf32> -> vector<8x32xf32>
    %c0_23 = arith.constant 0 : index
    %c0_24 = arith.constant 0 : index
    %33 = vector.load %arg25[%c0_23, %c0_24] : memref<8x32xf32, #tpu.memory_space<vmem>>, vector<8x32xf32>
    tpu.vector_store %arg25[%c0_23, %c0_24], %32 {strides = array<i32>} : memref<8x32xf32, #tpu.memory_space<vmem>>, vector<8x32xf32>,
    %c0_25 = arith.constant 0 : index
    %c8 = arith.constant 8 : index
    %34 = vector.load %arg24[%c0_25, %c8] : memref<8x32xf32, #tpu.memory_space<vmem>>, vector<8x8xf32>
    %c0_26 = arith.constant 0 : index
    %c8_27 = arith.constant 8 : index
    %35 = vector.load %arg22[%c0_26, %c8_27] : memref<8x32xf32, #tpu.memory_space<vmem>>, vector<8x8xf32>
    %cst_28 = arith.constant dense<0.000000e+00> : vector<8x8xf32>
    %36 = tpu.matmul %34, %35, %cst_28 {dimension_numbers = #tpu.dot_dimension_numbers<[1], [1], [0], [0], [0, 0, 1, 0], [], []>} : vector<8x8xf32>, vector<8x8xf32>, vector<8x8xf32> -> vector<8x8xf32>
    %cst_29 = arith.constant dense<0xFF800000> : vector<8xf32>
    %37 = vector.multi_reduction <maximumf>, %36, %cst_29 [1] : vector<8x8xf32> to vector<8xf32>
    %38 = vector.shape_cast %37 : vector<8xf32> to vector<8x1xf32>
    %39 = vector.broadcast %38 : vector<8x1xf32> to vector<8x8xf32>
    %40 = arith.subf %36, %39 : vector<8x8xf32>
    %41 = math.exp %40 : vector<8x8xf32>
    %cst_30 = arith.constant dense<0.000000e+00> : vector<8xf32>
    %42 = vector.multi_reduction <add>, %41, %cst_30 [1] : vector<8x8xf32> to vector<8xf32>
    %43 = vector.shape_cast %42 : vector<8xf32> to vector<8x1xf32>
    %44 = tpu.reciprocal %43 : vector<8x1xf32> -> vector<8x1xf32>
    %45 = vector.broadcast %44 : vector<8x1xf32> to vector<8x8xf32>
    %46 = arith.mulf %41, %45 : vector<8x8xf32>
    %c0_31 = arith.constant 0 : index
    %c0_32 = arith.constant 0 : index
    %c0_33 = arith.constant 0 : index
    %47 = vector.load %arg20[%c0_31, %c0_32, %c0_33] : memref<1x8x8xf32, #tpu.memory_space<vmem>>, vector<1x8x8xf32>
    %48 = vector.shape_cast %47 : vector<1x8x8xf32> to vector<8x8xf32>
    %49 = arith.addf %48, %46 : vector<8x8xf32>
    %c0_34 = arith.constant 0 : index
    %c0_35 = arith.constant 0 : index
    %c0_36 = arith.constant 0 : index
    %50 = vector.load %arg20[%c0_34, %c0_35, %c0_36] : memref<1x8x8xf32, #tpu.memory_space<vmem>>, vector<1x8x8xf32>
    %51 = vector.shape_cast %50 : vector<1x8x8xf32> to vector<8x8xf32>
    %52 = vector.shape_cast %49 : vector<8x8xf32> to vector<1x8x8xf32>
    tpu.vector_store %arg20[%c0_34, %c0_35, %c0_36], %52 {strides = array<i32>} : memref<1x8x8xf32, #tpu.memory_space<vmem>>, vector<1x8x8xf32>,
    %c0_37 = arith.constant 0 : index
    %c8_38 = arith.constant 8 : index
    %53 = vector.load %arg23[%c0_37, %c8_38] : memref<8x32xf32, #tpu.memory_space<vmem>>, vector<8x8xf32>
    %cst_39 = arith.constant dense<0.000000e+00> : vector<8x8xf32>
    %54 = tpu.matmul %46, %53, %cst_39 {dimension_numbers = #tpu.dot_dimension_numbers<[1], [0], [0], [1], [0, 0, 1, 1], [], []>} : vector<8x8xf32>, vector<8x8xf32>, vector<8x8xf32> -> vector<8x8xf32>
    %c8_40 = arith.constant 8 : index
    %c0_41 = arith.constant 0 : index
    %55 = vector.load %arg11[%c8_40, %c0_41] : memref<32x32xf32, #tpu.memory_space<vmem>>, vector<8x32xf32>
    %cst_42 = arith.constant dense<0.000000e+00> : vector<8x32xf32>
    %56 = tpu.matmul %54, %55, %cst_42 {dimension_numbers = #tpu.dot_dimension_numbers<[1], [0], [0], [1], [0, 0, 1, 1], [], []>} : vector<8x8xf32>, vector<8x32xf32>, vector<8x32xf32> -> vector<8x32xf32>
    %c0_43 = arith.constant 0 : index
    %c0_44 = arith.constant 0 : index
    %57 = vector.load %arg25[%c0_43, %c0_44] : memref<8x32xf32, #tpu.memory_space<vmem>>, vector<8x32xf32>
    %58 = arith.addf %57, %56 : vector<8x32xf32>
    %c0_45 = arith.constant 0 : index
    %c0_46 = arith.constant 0 : index
    %59 = vector.load %arg25[%c0_45, %c0_46] : memref<8x32xf32, #tpu.memory_space<vmem>>, vector<8x32xf32>
    tpu.vector_store %arg25[%c0_45, %c0_46], %58 {strides = array<i32>} : memref<8x32xf32, #tpu.memory_space<vmem>>, vector<8x32xf32>,
    %c0_47 = arith.constant 0 : index
    %c16 = arith.constant 16 : index
    %60 = vector.load %arg24[%c0_47, %c16] : memref<8x32xf32, #tpu.memory_space<vmem>>, vector<8x8xf32>
    %c0_48 = arith.constant 0 : index
    %c16_49 = arith.constant 16 : index
    %61 = vector.load %arg22[%c0_48, %c16_49] : memref<8x32xf32, #tpu.memory_space<vmem>>, vector<8x8xf32>
    %cst_50 = arith.constant dense<0.000000e+00> : vector<8x8xf32>
    %62 = tpu.matmul %60, %61, %cst_50 {dimension_numbers = #tpu.dot_dimension_numbers<[1], [1], [0], [0], [0, 0, 1, 0], [], []>} : vector<8x8xf32>, vector<8x8xf32>, vector<8x8xf32> -> vector<8x8xf32>
    %cst_51 = arith.constant dense<0xFF800000> : vector<8xf32>
    %63 = vector.multi_reduction <maximumf>, %62, %cst_51 [1] : vector<8x8xf32> to vector<8xf32>
    %64 = vector.shape_cast %63 : vector<8xf32> to vector<8x1xf32>
    %65 = vector.broadcast %64 : vector<8x1xf32> to vector<8x8xf32>
    %66 = arith.subf %62, %65 : vector<8x8xf32>
    %67 = math.exp %66 : vector<8x8xf32>
    %cst_52 = arith.constant dense<0.000000e+00> : vector<8xf32>
    %68 = vector.multi_reduction <add>, %67, %cst_52 [1] : vector<8x8xf32> to vector<8xf32>
    %69 = vector.shape_cast %68 : vector<8xf32> to vector<8x1xf32>
    %70 = tpu.reciprocal %69 : vector<8x1xf32> -> vector<8x1xf32>
    %71 = vector.broadcast %70 : vector<8x1xf32> to vector<8x8xf32>
    %72 = arith.mulf %67, %71 : vector<8x8xf32>
    %c0_53 = arith.constant 0 : index
    %c0_54 = arith.constant 0 : index
    %c0_55 = arith.constant 0 : index
    %73 = vector.load %arg20[%c0_53, %c0_54, %c0_55] : memref<1x8x8xf32, #tpu.memory_space<vmem>>, vector<1x8x8xf32>
    %74 = vector.shape_cast %73 : vector<1x8x8xf32> to vector<8x8xf32>
    %75 = arith.addf %74, %72 : vector<8x8xf32>
    %c0_56 = arith.constant 0 : index
    %c0_57 = arith.constant 0 : index
    %c0_58 = arith.constant 0 : index
    %76 = vector.load %arg20[%c0_56, %c0_57, %c0_58] : memref<1x8x8xf32, #tpu.memory_space<vmem>>, vector<1x8x8xf32>
    %77 = vector.shape_cast %76 : vector<1x8x8xf32> to vector<8x8xf32>
    %78 = vector.shape_cast %75 : vector<8x8xf32> to vector<1x8x8xf32>
    tpu.vector_store %arg20[%c0_56, %c0_57, %c0_58], %78 {strides = array<i32>} : memref<1x8x8xf32, #tpu.memory_space<vmem>>, vector<1x8x8xf32>,
    %c0_59 = arith.constant 0 : index
    %c16_60 = arith.constant 16 : index
    %79 = vector.load %arg23[%c0_59, %c16_60] : memref<8x32xf32, #tpu.memory_space<vmem>>, vector<8x8xf32>
    %cst_61 = arith.constant dense<0.000000e+00> : vector<8x8xf32>
    %80 = tpu.matmul %72, %79, %cst_61 {dimension_numbers = #tpu.dot_dimension_numbers<[1], [0], [0], [1], [0, 0, 1, 1], [], []>} : vector<8x8xf32>, vector<8x8xf32>, vector<8x8xf32> -> vector<8x8xf32>
    %c16_62 = arith.constant 16 : index
    %c0_63 = arith.constant 0 : index
    %81 = vector.load %arg11[%c16_62, %c0_63] : memref<32x32xf32, #tpu.memory_space<vmem>>, vector<8x32xf32>
    %cst_64 = arith.constant dense<0.000000e+00> : vector<8x32xf32>
    %82 = tpu.matmul %80, %81, %cst_64 {dimension_numbers = #tpu.dot_dimension_numbers<[1], [0], [0], [1], [0, 0, 1, 1], [], []>} : vector<8x8xf32>, vector<8x32xf32>, vector<8x32xf32> -> vector<8x32xf32>
    %c0_65 = arith.constant 0 : index
    %c0_66 = arith.constant 0 : index
    %83 = vector.load %arg25[%c0_65, %c0_66] : memref<8x32xf32, #tpu.memory_space<vmem>>, vector<8x32xf32>
    %84 = arith.addf %83, %82 : vector<8x32xf32>
    %c0_67 = arith.constant 0 : index
    %c0_68 = arith.constant 0 : index
    %85 = vector.load %arg25[%c0_67, %c0_68] : memref<8x32xf32, #tpu.memory_space<vmem>>, vector<8x32xf32>
    tpu.vector_store %arg25[%c0_67, %c0_68], %84 {strides = array<i32>} : memref<8x32xf32, #tpu.memory_space<vmem>>, vector<8x32xf32>,
    %c0_69 = arith.constant 0 : index
    %c24 = arith.constant 24 : index
    %86 = vector.load %arg24[%c0_69, %c24] : memref<8x32xf32, #tpu.memory_space<vmem>>, vector<8x8xf32>
    %c0_70 = arith.constant 0 : index
    %c24_71 = arith.constant 24 : index
    %87 = vector.load %arg22[%c0_70, %c24_71] : memref<8x32xf32, #tpu.memory_space<vmem>>, vector<8x8xf32>
    %cst_72 = arith.constant dense<0.000000e+00> : vector<8x8xf32>
    %88 = tpu.matmul %86, %87, %cst_72 {dimension_numbers = #tpu.dot_dimension_numbers<[1], [1], [0], [0], [0, 0, 1, 0], [], []>} : vector<8x8xf32>, vector<8x8xf32>, vector<8x8xf32> -> vector<8x8xf32>
    %cst_73 = arith.constant dense<0xFF800000> : vector<8xf32>
    %89 = vector.multi_reduction <maximumf>, %88, %cst_73 [1] : vector<8x8xf32> to vector<8xf32>
    %90 = vector.shape_cast %89 : vector<8xf32> to vector<8x1xf32>
    %91 = vector.broadcast %90 : vector<8x1xf32> to vector<8x8xf32>
    %92 = arith.subf %88, %91 : vector<8x8xf32>
    %93 = math.exp %92 : vector<8x8xf32>
    %cst_74 = arith.constant dense<0.000000e+00> : vector<8xf32>
    %94 = vector.multi_reduction <add>, %93, %cst_74 [1] : vector<8x8xf32> to vector<8xf32>
    %95 = vector.shape_cast %94 : vector<8xf32> to vector<8x1xf32>
    %96 = tpu.reciprocal %95 : vector<8x1xf32> -> vector<8x1xf32>
    %97 = vector.broadcast %96 : vector<8x1xf32> to vector<8x8xf32>
    %98 = arith.mulf %93, %97 : vector<8x8xf32>
    %c0_75 = arith.constant 0 : index
    %c0_76 = arith.constant 0 : index
    %c0_77 = arith.constant 0 : index
    %99 = vector.load %arg20[%c0_75, %c0_76, %c0_77] : memref<1x8x8xf32, #tpu.memory_space<vmem>>, vector<1x8x8xf32>
    %100 = vector.shape_cast %99 : vector<1x8x8xf32> to vector<8x8xf32>
    %101 = arith.addf %100, %98 : vector<8x8xf32>
    %cst_78 = arith.constant 2.500000e-01 : f32
    %102 = vector.broadcast %cst_78 : f32 to vector<8x8xf32>
    %103 = arith.mulf %101, %102 : vector<8x8xf32>
    %c0_79 = arith.constant 0 : index
    %c0_80 = arith.constant 0 : index
    %c0_81 = arith.constant 0 : index
    %104 = vector.load %arg20[%c0_79, %c0_80, %c0_81] : memref<1x8x8xf32, #tpu.memory_space<vmem>>, vector<1x8x8xf32>
    %105 = vector.shape_cast %104 : vector<1x8x8xf32> to vector<8x8xf32>
    %106 = vector.shape_cast %103 : vector<8x8xf32> to vector<1x8x8xf32>
    tpu.vector_store %arg20[%c0_79, %c0_80, %c0_81], %106 {strides = array<i32>} : memref<1x8x8xf32, #tpu.memory_space<vmem>>, vector<1x8x8xf32>,
    %c0_82 = arith.constant 0 : index
    %c24_83 = arith.constant 24 : index
    %107 = vector.load %arg23[%c0_82, %c24_83] : memref<8x32xf32, #tpu.memory_space<vmem>>, vector<8x8xf32>
    %cst_84 = arith.constant dense<0.000000e+00> : vector<8x8xf32>
    %108 = tpu.matmul %98, %107, %cst_84 {dimension_numbers = #tpu.dot_dimension_numbers<[1], [0], [0], [1], [0, 0, 1, 1], [], []>} : vector<8x8xf32>, vector<8x8xf32>, vector<8x8xf32> -> vector<8x8xf32>
    %c24_85 = arith.constant 24 : index
    %c0_86 = arith.constant 0 : index
    %109 = vector.load %arg11[%c24_85, %c0_86] : memref<32x32xf32, #tpu.memory_space<vmem>>, vector<8x32xf32>
    %cst_87 = arith.constant dense<0.000000e+00> : vector<8x32xf32>
    %110 = tpu.matmul %108, %109, %cst_87 {dimension_numbers = #tpu.dot_dimension_numbers<[1], [0], [0], [1], [0, 0, 1, 1], [], []>} : vector<8x8xf32>, vector<8x32xf32>, vector<8x32xf32> -> vector<8x32xf32>
    %c0_88 = arith.constant 0 : index
    %c0_89 = arith.constant 0 : index
    %111 = vector.load %arg25[%c0_88, %c0_89] : memref<8x32xf32, #tpu.memory_space<vmem>>, vector<8x32xf32>
    %112 = arith.addf %111, %110 : vector<8x32xf32>
    %c0_90 = arith.constant 0 : index
    %c0_91 = arith.constant 0 : index
    %113 = vector.load %arg25[%c0_90, %c0_91] : memref<8x32xf32, #tpu.memory_space<vmem>>, vector<8x32xf32>
    tpu.vector_store %arg25[%c0_90, %c0_91], %112 {strides = array<i32>} : memref<8x32xf32, #tpu.memory_space<vmem>>, vector<8x32xf32>,
    %c0_92 = arith.constant 0 : index
    %114 = arith.index_cast %4 : i32 to index
    %c0_93 = arith.constant 0 : index
    %115 = vector.load %arg2[%c0_92, %114, %c0_93] : memref<1x8x32xf32, #tpu.memory_space<vmem>>, vector<1x8x32xf32>
    %116 = vector.shape_cast %115 : vector<1x8x32xf32> to vector<8x32xf32>
    %c0_94 = arith.constant 0 : index
    %c0_95 = arith.constant 0 : index
    %117 = vector.load %arg25[%c0_94, %c0_95] : memref<8x32xf32, #tpu.memory_space<vmem>>, vector<8x32xf32>
    %118 = arith.addf %116, %117 : vector<8x32xf32>
    %c0_96 = arith.constant 0 : index
    %c0_97 = arith.constant 0 : index
    %119 = vector.load %arg12[%c0_96, %c0_97] : memref<1x32xf32, #tpu.memory_space<vmem>>, vector<1x32xf32>
    %120 = vector.broadcast %119 : vector<1x32xf32> to vector<8x32xf32>
    %121 = arith.addf %118, %120 : vector<8x32xf32>
    %cst_98 = arith.constant dense<0.000000e+00> : vector<8xf32>
    %122 = vector.multi_reduction <add>, %121, %cst_98 [1] : vector<8x32xf32> to vector<8xf32>
    %123 = vector.shape_cast %122 : vector<8xf32> to vector<8x1xf32>
    %cst_99 = arith.constant 3.200000e+01 : f32
    %124 = vector.broadcast %cst_99 : f32 to vector<8x1xf32>
    %125 = arith.divf %123, %124 : vector<8x1xf32>
    %126 = vector.broadcast %125 : vector<8x1xf32> to vector<8x32xf32>
    %127 = arith.subf %121, %126 : vector<8x32xf32>
    %128 = arith.mulf %127, %127 : vector<8x32xf32>
    %cst_100 = arith.constant dense<0.000000e+00> : vector<8xf32>
    %129 = vector.multi_reduction <add>, %128, %cst_100 [1] : vector<8x32xf32> to vector<8xf32>
    %130 = vector.shape_cast %129 : vector<8xf32> to vector<8x1xf32>
    %cst_101 = arith.constant 3.200000e+01 : f32
    %131 = vector.broadcast %cst_101 : f32 to vector<8x1xf32>
    %132 = arith.divf %130, %131 : vector<8x1xf32>
    %133 = vector.broadcast %125 : vector<8x1xf32> to vector<8x32xf32>
    %134 = arith.subf %121, %133 : vector<8x32xf32>
    %cst_102 = arith.constant 9.99999974E-6 : f32
    %135 = vector.broadcast %cst_102 : f32 to vector<8x1xf32>
    %136 = arith.addf %132, %135 : vector<8x1xf32>
    %137 = math.rsqrt %136 : vector<8x1xf32>
    %138 = vector.broadcast %137 : vector<8x1xf32> to vector<8x32xf32>
    %139 = arith.mulf %134, %138 : vector<8x32xf32>
    %c0_103 = arith.constant 0 : index
    %c0_104 = arith.constant 0 : index
    %140 = vector.load %arg13[%c0_103, %c0_104] : memref<1x32xf32, #tpu.memory_space<vmem>>, vector<1x32xf32>
    %141 = vector.broadcast %140 : vector<1x32xf32> to vector<8x32xf32>
    %142 = arith.mulf %139, %141 : vector<8x32xf32>
    %c0_105 = arith.constant 0 : index
    %c0_106 = arith.constant 0 : index
    %143 = vector.load %arg14[%c0_105, %c0_106] : memref<1x32xf32, #tpu.memory_space<vmem>>, vector<1x32xf32>
    %144 = vector.broadcast %143 : vector<1x32xf32> to vector<8x32xf32>
    %145 = arith.addf %142, %144 : vector<8x32xf32>
    %c0_107 = arith.constant 0 : index
    %c0_108 = arith.constant 0 : index
    %146 = vector.load %arg15[%c0_107, %c0_108] : memref<32x128xf32, #tpu.memory_space<vmem>>, vector<32x128xf32>
    %cst_109 = arith.constant dense<0.000000e+00> : vector<8x128xf32>
    %147 = tpu.matmul %145, %146, %cst_109 {dimension_numbers = #tpu.dot_dimension_numbers<[1], [0], [0], [1], [0, 0, 1, 1], [], []>} : vector<8x32xf32>, vector<32x128xf32>, vector<8x128xf32> -> vector<8x128xf32>
    %c0_110 = arith.constant 0 : index
    %c0_111 = arith.constant 0 : index
    %148 = vector.load %arg16[%c0_110, %c0_111] : memref<1x128xf32, #tpu.memory_space<vmem>>, vector<1x128xf32>
    %149 = vector.broadcast %148 : vector<1x128xf32> to vector<8x128xf32>
    %150 = arith.addf %147, %149 : vector<8x128xf32>
    %cst_112 = arith.constant 1.702000e+00 : f32
    %151 = vector.broadcast %cst_112 : f32 to vector<8x128xf32>
    %152 = arith.mulf %151, %150 : vector<8x128xf32>
    %153 = arith.negf %152 : vector<8x128xf32>
    %154 = math.exp %153 : vector<8x128xf32>
    %cst_113 = arith.constant 1.000000e+00 : f32
    %155 = vector.broadcast %cst_113 : f32 to vector<8x128xf32>
    %156 = arith.addf %155, %154 : vector<8x128xf32>
    %157 = arith.divf %155, %156 : vector<8x128xf32>
    %158 = arith.mulf %150, %157 : vector<8x128xf32>
    %c0_114 = arith.constant 0 : index
    %c0_115 = arith.constant 0 : index
    %159 = vector.load %arg17[%c0_114, %c0_115] : memref<128x32xf32, #tpu.memory_space<vmem>>, vector<128x32xf32>
    %cst_116 = arith.constant dense<0.000000e+00> : vector<8x32xf32>
    %160 = tpu.matmul %158, %159, %cst_116 {dimension_numbers = #tpu.dot_dimension_numbers<[1], [0], [0], [1], [0, 0, 1, 1], [], []>} : vector<8x128xf32>, vector<128x32xf32>, vector<8x32xf32> -> vector<8x32xf32>
    %c0_117 = arith.constant 0 : index
    %c0_118 = arith.constant 0 : index
    %161 = vector.load %arg18[%c0_117, %c0_118] : memref<1x32xf32, #tpu.memory_space<vmem>>, vector<1x32xf32>
    %162 = vector.broadcast %161 : vector<1x32xf32> to vector<8x32xf32>
    %163 = arith.addf %160, %162 : vector<8x32xf32>
    %164 = arith.addf %121, %163 : vector<8x32xf32>
    %c0_119 = arith.constant 0 : index
    %c0_120 = arith.constant 0 : index
    %c0_121 = arith.constant 0 : index
    %165 = vector.load %arg19[%c0_119, %c0_120, %c0_121] : memref<1x8x32xf32, #tpu.memory_space<vmem>>, vector<1x8x32xf32>
    %166 = vector.shape_cast %165 : vector<1x8x32xf32> to vector<8x32xf32>
    %167 = vector.shape_cast %164 : vector<8x32xf32> to vector<1x8x32xf32>
    tpu.vector_store %arg19[%c0_119, %c0_120, %c0_121], %167 {strides = array<i32>} : memref<1x8x32xf32, #tpu.memory_space<vmem>>, vector<1x8x32xf32>,
    return
  }
  func.func @transform_0(%arg0: i32, %arg1: i32) -> (i32, i32, i32) {
    %c0_i32 = arith.constant 0 : i32
    %c0_i32_0 = arith.constant 0 : i32
    %c0_i32_1 = arith.constant 0 : i32
    return %arg0, %c0_i32, %c0_i32_0 : i32, i32, i32
  }
  func.func @transform_1(%arg0: i32, %arg1: i32) -> (i32, i32) {
    %c0_i32 = arith.constant 0 : i32
    %c0_i32_0 = arith.constant 0 : i32
    %c0_i32_1 = arith.constant 0 : i32
    return %c0_i32, %c0_i32_0 : i32, i32
  }
  func.func @transform_2(%arg0: i32, %arg1: i32) -> (i32, i32) {
    %c0_i32 = arith.constant 0 : i32
    %c0_i32_0 = arith.constant 0 : i32
    %c0_i32_1 = arith.constant 0 : i32
    return %c0_i32, %c0_i32_0 : i32, i32
  }
  func.func @transform_3(%arg0: i32, %arg1: i32) -> (i32, i32) {
    %c0_i32 = arith.constant 0 : i32
    %c0_i32_0 = arith.constant 0 : i32
    %c0_i32_1 = arith.constant 0 : i32
    return %c0_i32, %c0_i32_0 : i32, i32
  }
  func.func @transform_4(%arg0: i32, %arg1: i32) -> (i32, i32) {
    %c0_i32 = arith.constant 0 : i32
    %c0_i32_0 = arith.constant 0 : i32
    %c0_i32_1 = arith.constant 0 : i32
    return %c0_i32, %c0_i32_0 : i32, i32
  }
  func.func @transform_5(%arg0: i32, %arg1: i32) -> (i32, i32) {
    %c0_i32 = arith.constant 0 : i32
    %c0_i32_0 = arith.constant 0 : i32
    %c0_i32_1 = arith.constant 0 : i32
    return %c0_i32, %c0_i32_0 : i32, i32
  }
  func.func @transform_6(%arg0: i32, %arg1: i32) -> (i32, i32) {
    %c0_i32 = arith.constant 0 : i32
    %c0_i32_0 = arith.constant 0 : i32
    %c0_i32_1 = arith.constant 0 : i32
    return %c0_i32, %c0_i32_0 : i32, i32
  }
  func.func @transform_7(%arg0: i32, %arg1: i32) -> (i32, i32) {
    %c0_i32 = arith.constant 0 : i32
    %c0_i32_0 = arith.constant 0 : i32
    %c0_i32_1 = arith.constant 0 : i32
    return %c0_i32, %c0_i32_0 : i32, i32
  }
  func.func @transform_8(%arg0: i32, %arg1: i32) -> (i32, i32) {
    %c0_i32 = arith.constant 0 : i32
    %c0_i32_0 = arith.constant 0 : i32
    %c0_i32_1 = arith.constant 0 : i32
    return %c0_i32, %c0_i32_0 : i32, i32
  }
  func.func @transform_9(%arg0: i32, %arg1: i32) -> (i32, i32) {
    %c0_i32 = arith.constant 0 : i32
    %c0_i32_0 = arith.constant 0 : i32
    %c0_i32_1 = arith.constant 0 : i32
    return %c0_i32, %c0_i32_0 : i32, i32
  }
  func.func @transform_10(%arg0: i32, %arg1: i32) -> (i32, i32) {
    %c0_i32 = arith.constant 0 : i32
    %c0_i32_0 = arith.constant 0 : i32
    %c0_i32_1 = arith.constant 0 : i32
    return %c0_i32, %c0_i32_0 : i32, i32
  }
  func.func @transform_11(%arg0: i32, %arg1: i32) -> (i32, i32) {
    %c0_i32 = arith.constant 0 : i32
    %c0_i32_0 = arith.constant 0 : i32
    %c0_i32_1 = arith.constant 0 : i32
    return %c0_i32, %c0_i32_0 : i32, i32
  }
  func.func @transform_12(%arg0: i32, %arg1: i32) -> (i32, i32) {
    %c0_i32 = arith.constant 0 : i32
    %c0_i32_0 = arith.constant 0 : i32
    %c0_i32_1 = arith.constant 0 : i32
    return %c0_i32, %c0_i32_0 : i32, i32
  }
  func.func @transform_13(%arg0: i32, %arg1: i32) -> (i32, i32) {
    %c0_i32 = arith.constant 0 : i32
    %c0_i32_0 = arith.constant 0 : i32
    %c0_i32_1 = arith.constant 0 : i32
    return %c0_i32, %c0_i32_0 : i32, i32
  }
  func.func @transform_14(%arg0: i32, %arg1: i32) -> (i32, i32) {
    %c0_i32 = arith.constant 0 : i32
    %c0_i32_0 = arith.constant 0 : i32
    %c0_i32_1 = arith.constant 0 : i32
    return %c0_i32, %c0_i32_0 : i32, i32
  }
  func.func @transform_15(%arg0: i32, %arg1: i32) -> (i32, i32) {
    %c0_i32 = arith.constant 0 : i32
    %c0_i32_0 = arith.constant 0 : i32
    %c0_i32_1 = arith.constant 0 : i32
    return %c0_i32, %c0_i32_0 : i32, i32
  }
  func.func @transform_16(%arg0: i32, %arg1: i32) -> (i32, i32) {
    %c0_i32 = arith.constant 0 : i32
    %c0_i32_0 = arith.constant 0 : i32
    %c0_i32_1 = arith.constant 0 : i32
    return %c0_i32, %c0_i32_0 : i32, i32
  }
  func.func @transform_17(%arg0: i32, %arg1: i32) -> (i32, i32, i32) {
    %c0_i32 = arith.constant 0 : i32
    %c0_i32_0 = arith.constant 0 : i32
    return %arg0, %arg1, %c0_i32 : i32, i32, i32
  }
  func.func @transform_18(%arg0: i32, %arg1: i32) -> (i32, i32, i32) {
    %c0_i32 = arith.constant 0 : i32
    %c0_i32_0 = arith.constant 0 : i32
    return %arg0, %arg1, %c0_i32 : i32, i32, i32
  }
}

</mosaic_0001>

<llo_original>
// kernel: tpu_custom_call.1
$region0: #{tpu_custom_call.1}
  #allocation0 [shape = 'u32[]', space=smem, size = 0x4, offset = 0x4, fixed_abs, tag = 'smem constant byte address 0x4 - core index']
  #allocation1 [shape = 'u32[72,128]{1,0:T(1,128)}', space=vmem, size = 0x9000, scoped, tag = 'internal scratch']
  #allocation2 [shape = 'f32[8,32]{1,0:T(8,128)}', space=vmem, size = 0x1000, scoped, tag = 'scratch operand']
  #allocation3 [shape = 'f32[8,32]{1,0:T(8,128)}', space=vmem, size = 0x1000, scoped, tag = 'scratch operand']
  #allocation4 [shape = 'f32[8,32]{1,0:T(8,128)}', space=vmem, size = 0x1000, scoped, tag = 'scratch operand']
  #allocation5 [shape = 'f32[8,32]{1,0:T(8,128)}', space=vmem, size = 0x1000, scoped, tag = 'scratch operand']
  #allocation6 [shape = 'f32[8,32]{1,0:T(8,128)}', space=vmem, size = 0x1000, scoped, tag = 'scratch operand']
  %s0 = inlined_call_operand.hbm [shape: f32[2,8,32], index: 0, kind: input, shape index: {}]
  %s1 = inlined_call_operand.hbm [shape: f32[1,32], index: 1, kind: input, shape index: {}]
  %s2 = inlined_call_operand.vmem [shape: f32[1,32], index: 2, kind: input, shape index: {}]
  %s3 = inlined_call_operand.vmem [shape: f32[32,32], index: 3, kind: input, shape index: {}]
  %s4 = inlined_call_operand.vmem [shape: f32[1,32], index: 4, kind: input, shape index: {}]
  %s5 = inlined_call_operand.vmem [shape: f32[32,32], index: 5, kind: input, shape index: {}]
  %s6 = inlined_call_operand.vmem [shape: f32[1,32], index: 6, kind: input, shape index: {}]
  %s7 = inlined_call_operand.vmem [shape: f32[32,32], index: 7, kind: input, shape index: {}]
  %s8 = inlined_call_operand.vmem [shape: f32[1,32], index: 8, kind: input, shape index: {}]
  %s9 = inlined_call_operand.vmem [shape: f32[32,32], index: 9, kind: input, shape index: {}]
  %s10 = inlined_call_operand.vmem [shape: f32[1,32], index: 10, kind: input, shape index: {}]
  %s11 = inlined_call_operand.vmem [shape: f32[1,32], index: 11, kind: input, shape index: {}]
  %s12 = inlined_call_operand.vmem [shape: f32[1,32], index: 12, kind: input, shape index: {}]
  %s13 = inlined_call_operand.vmem [shape: f32[32,128], index: 13, kind: input, shape index: {}]
  %s14 = inlined_call_operand.vmem [shape: f32[1,128], index: 14, kind: input, shape index: {}]
  %s15 = inlined_call_operand.vmem [shape: f32[128,32], index: 15, kind: input, shape index: {}]
  %s16 = inlined_call_operand.vmem [shape: f32[1,32], index: 16, kind: input, shape index: {}]
  %s17 = inlined_call_operand.hbm [shape: f32[2,8,32], index: 17, kind: output, shape index: {0}]
  %s18 = inlined_call_operand.hbm [shape: f32[2,8,8], index: 18, kind: output, shape index: {1}]
  %19 = xla_tuple %s17, %s18
  %s20 = sld [smem:[#allocation0]]
  $region121: #{tpu_custom_call.1} parent=0
    _
  %s22 = ssub.s32 1, %s20
  %s23 = scalar_select 0, %s22, %s20
  $region1: #{tpu_custom_call.1} parent=0
    #allocation7 [shape = 'u8[8192]{0}', space=vmem, size = 0x2000, scoped, tag = 'input window, operand 0']
    #allocation8 [shape = 's32[2]{0}', space=sflag, size = 0x8, scoped, tag = 'scoped memory for tpu_custom_call.1']
    #allocation9 [shape = 's32[2]{0}', space=sflag, size = 0x8, scoped, tag = 'scoped memory for tpu_custom_call.1']
    #allocation10 [shape = 'u8[512]{0}', space=vmem, size = 0x400, scoped, tag = 'input window, operand 1, single buffered']
    #allocation11 [shape = 's32[1]{0}', space=sflag, size = 0x4, scoped, tag = 'scoped memory for tpu_custom_call.1']
    #allocation12 [shape = 'u8[8192]{0}', space=vmem, size = 0x2000, scoped, tag = 'output window, operand 0']
    #allocation13 [shape = 'u8[8192]{0}', space=vmem, size = 0x2000, scoped, tag = 'output window, operand 1']
    #allocation14 [shape = 's32[2]{0}', space=sflag, size = 0x8, scoped, tag = 'scoped memory for tpu_custom_call.1']
    %24 = vsyncpa [#allocation8], 0
    %s25 = scalar_lea.sflag [#allocation8], 1
    %26 = vsyncpa %s25, 0
    %27 = vsyncpa [#allocation11], 0
    %28 = vsyncpa [#allocation9], 0
    %s29 = scalar_lea.sflag [#allocation9], 1
    %30 = vsyncpa %s29, 0
    %31 = vsyncpa [#allocation14], 0
    %s32 = scalar_lea.sflag [#allocation14], 1
    %33 = vsyncpa %s32, 0
    loop: start=0, step=1, limit=4
    $region2: #{tpu_custom_call.1} parent=1 // loop_pre_header
      _
    $region3: #{tpu_custom_call.1} parent=1 // loop_header
      %s35 = sphi 0, %s39
      %p36 = scmp.ge.s32.totalorder %s35, 4
      %s42 = sphi 0, %s54
      %s43 = sphi 0, %s50
      %s44 = sphi 0, %s42
      %s45 = sphi 0, %s43
      %s46 = sphi 0, %s44
      %s47 = sphi 0, %s45
      %s57 = sphi 0, %s59
      %s60 = sphi 0, %s57
      %s61 = sphi 0, %s60
      %s77 = sphi 0, %s61
      %s81 = sphi 0, %s81
      %s83 = sphi 0, %s81
      %s84 = sphi 0, %s83
      %s98 = sphi 0, %s84
      %s102 = sphi 0, %s102
      %s104 = sphi 0, %s102
      %s105 = sphi 0, %s104
      %s119 = sphi 0, %s105
      %s123 = sphi 0, %s123
      %s125 = sphi 0, %s123
      %s126 = sphi 0, %s125
      %s140 = sphi 0, %s126
      %s144 = sphi 0, %s144
      %s146 = sphi 0, %s144
      %s147 = sphi 0, %s146
      %s161 = sphi 0, %s147
      %s165 = sphi 0, %s165
      %s167 = sphi 0, %s165
      %s168 = sphi 0, %s167
      %s182 = sphi 0, %s168
      %s186 = sphi 0, %s186
      %s188 = sphi 0, %s186
      %s189 = sphi 0, %s188
      %s203 = sphi 0, %s189
      %s207 = sphi 0, %s207
      %s209 = sphi 0, %s207
      %s210 = sphi 0, %s209
      %s224 = sphi 0, %s210
      %s228 = sphi 0, %s228
      %s230 = sphi 0, %s228
      %s231 = sphi 0, %s230
      %s245 = sphi 0, %s231
      %s249 = sphi 0, %s249
      %s251 = sphi 0, %s249
      %s252 = sphi 0, %s251
      %s266 = sphi 0, %s252
      %s270 = sphi 0, %s270
      %s272 = sphi 0, %s270
      %s273 = sphi 0, %s272
      %s287 = sphi 0, %s273
      %s291 = sphi 0, %s291
      %s293 = sphi 0, %s291
      %s294 = sphi 0, %s293
      %s308 = sphi 0, %s294
      %s312 = sphi 0, %s312
      %s314 = sphi 0, %s312
      %s315 = sphi 0, %s314
      %s329 = sphi 0, %s315
      %s333 = sphi 0, %s333
      %s335 = sphi 0, %s333
      %s336 = sphi 0, %s335
      %s350 = sphi 0, %s336
      %s354 = sphi 0, %s354
      %s356 = sphi 0, %s354
      %s357 = sphi 0, %s356
      %s371 = sphi 0, %s357
      %s375 = sphi 0, %s375
      %s377 = sphi 0, %s375
      %s378 = sphi 0, %s377
      %s392 = sphi 0, %s378
      %s396 = sphi 0, %s396
      %s398 = sphi 0, %s396
      %s399 = sphi 0, %s398
      %s413 = sphi 0, %s399
      %s421 = sphi 0, %s423
      %s424 = sphi 0, %s421
      %s425 = sphi 0, %s424
      %s441 = sphi 0, %s425
      %s449 = sphi 0, %s451
      %s452 = sphi 0, %s449
      %s453 = sphi 0, %s452
      %s469 = sphi 0, %s453
    $region4: #{tpu_custom_call.1} parent=1 // loop_header_branch
      %38 = sbr.rel (%p36) target = $region8
    $region5: #{tpu_custom_call.1} parent=1 // loop_body
      %s40 = ssub.s32 %s35, 1
      %s41 = ssub.s32 %s35, 2
      %s48 = sadd.s32 1, %s43
      %p49 = scmp.ge.s32.totalorder %s48, 1
      %s50 = scalar_select %p49, 0, %s48
      %s51 = sadd.s32 1, %s42
      %s52 = scalar_select %p49, %s51, %s42
      %p53 = scmp.ge.s32.totalorder %s52, 2
      %s54 = scalar_select %p53, 0, %s52
      %s55 = ssub.s32 %s42, %s54
      %p56 = scmp.eq.s32.totalorder %s55, 0
      %s58 = sadd.s32 %s57, 1
      %s59 = scalar_select %p56, %s57, %s58
      %p62 = pneg %p56
      %p63 = scmp.eq.s32.totalorder %s35, 1
      %p64 = por %p62, %p63
      %p65 = scmp.ne.s32.totalorder %s57, %s60
      %p66 = scmp.eq.s32.totalorder %s35, 0
      %p67 = por %p65, %p66
      %p68 = scmp.ne.s32.totalorder %s57, %s60
      %p69 = scmp.eq.s32.totalorder %s40, 1
      %p70 = por %p68, %p69
      %p71 = scmp.ne.s32.totalorder %s60, %s61
      %p72 = scmp.eq.s32.totalorder %s40, 0
      %p73 = por %p71, %p72
      %p74 = scmp.ne.s32.totalorder %s60, %s61
      %p75 = scmp.eq.s32.totalorder %s41, 1
      %p76 = por %p74, %p75
      %p78 = scmp.ne.s32.totalorder %s61, %s77
      %p79 = scmp.eq.s32.totalorder %s41, 0
      %p80 = por %p78, %p79
      %s82 = sadd.s32 %s81, 1
      %p85 = scmp.eq.s32.totalorder %s35, 1
      %p86 = scmp.ne.s32.totalorder %s81, %s83
      %p87 = scmp.eq.s32.totalorder %s35, 0
      %p88 = por %p86, %p87
      %p89 = scmp.ne.s32.totalorder %s81, %s83
      %p90 = scmp.eq.s32.totalorder %s40, 1
      %p91 = por %p89, %p90
      %p92 = scmp.ne.s32.totalorder %s83, %s84
      %p93 = scmp.eq.s32.totalorder %s40, 0
      %p94 = por %p92, %p93
      %p95 = scmp.ne.s32.totalorder %s83, %s84
      %p96 = scmp.eq.s32.totalorder %s41, 1
      %p97 = por %p95, %p96
      %p99 = scmp.ne.s32.totalorder %s84, %s98
      %p100 = scmp.eq.s32.totalorder %s41, 0
      %p101 = por %p99, %p100
      %s103 = sadd.s32 %s102, 1
      %p106 = scmp.eq.s32.totalorder %s35, 1
      %p107 = scmp.ne.s32.totalorder %s102, %s104
      %p108 = scmp.eq.s32.totalorder %s35, 0
      %p109 = por %p107, %p108
      %p110 = scmp.ne.s32.totalorder %s102, %s104
      %p111 = scmp.eq.s32.totalorder %s40, 1
      %p112 = por %p110, %p111
      %p113 = scmp.ne.s32.totalorder %s104, %s105
      %p114 = scmp.eq.s32.totalorder %s40, 0
      %p115 = por %p113, %p114
      %p116 = scmp.ne.s32.totalorder %s104, %s105
      %p117 = scmp.eq.s32.totalorder %s41, 1
      %p118 = por %p116, %p117
      %p120 = scmp.ne.s32.totalorder %s105, %s119
      %p121 = scmp.eq.s32.totalorder %s41, 0
      %p122 = por %p120, %p121
      %s124 = sadd.s32 %s123, 1
      %p127 = scmp.eq.s32.totalorder %s35, 1
      %p128 = scmp.ne.s32.totalorder %s123, %s125
      %p129 = scmp.eq.s32.totalorder %s35, 0
      %p130 = por %p128, %p129
      %p131 = scmp.ne.s32.totalorder %s123, %s125
      %p132 = scmp.eq.s32.totalorder %s40, 1
      %p133 = por %p131, %p132
      %p134 = scmp.ne.s32.totalorder %s125, %s126
      %p135 = scmp.eq.s32.totalorder %s40, 0
      %p136 = por %p134, %p135
      %p137 = scmp.ne.s32.totalorder %s125, %s126
      %p138 = scmp.eq.s32.totalorder %s41, 1
      %p139 = por %p137, %p138
      %p141 = scmp.ne.s32.totalorder %s126, %s140
      %p142 = scmp.eq.s32.totalorder %s41, 0
      %p143 = por %p141, %p142
      %s145 = sadd.s32 %s144, 1
      %p148 = scmp.eq.s32.totalorder %s35, 1
      %p149 = scmp.ne.s32.totalorder %s144, %s146
      %p150 = scmp.eq.s32.totalorder %s35, 0
      %p151 = por %p149, %p150
      %p152 = scmp.ne.s32.totalorder %s144, %s146
      %p153 = scmp.eq.s32.totalorder %s40, 1
      %p154 = por %p152, %p153
      %p155 = scmp.ne.s32.totalorder %s146, %s147
      %p156 = scmp.eq.s32.totalorder %s40, 0
      %p157 = por %p155, %p156
      %p158 = scmp.ne.s32.totalorder %s146, %s147
      %p159 = scmp.eq.s32.totalorder %s41, 1
      %p160 = por %p158, %p159
      %p162 = scmp.ne.s32.totalorder %s147, %s161
      %p163 = scmp.eq.s32.totalorder %s41, 0
      %p164 = por %p162, %p163
      %s166 = sadd.s32 %s165, 1
      %p169 = scmp.eq.s32.totalorder %s35, 1
      %p170 = scmp.ne.s32.totalorder %s165, %s167
      %p171 = scmp.eq.s32.totalorder %s35, 0
      %p172 = por %p170, %p171
      %p173 = scmp.ne.s32.totalorder %s165, %s167
      %p174 = scmp.eq.s32.totalorder %s40, 1
      %p175 = por %p173, %p174
      %p176 = scmp.ne.s32.totalorder %s167, %s168
      %p177 = scmp.eq.s32.totalorder %s40, 0
      %p178 = por %p176, %p177
      %p179 = scmp.ne.s32.totalorder %s167, %s168
      %p180 = scmp.eq.s32.totalorder %s41, 1
      %p181 = por %p179, %p180
      %p183 = scmp.ne.s32.totalorder %s168, %s182
      %p184 = scmp.eq.s32.totalorder %s41, 0
      %p185 = por %p183, %p184
      %s187 = sadd.s32 %s186, 1
      %p190 = scmp.eq.s32.totalorder %s35, 1
      %p191 = scmp.ne.s32.totalorder %s186, %s188
      %p192 = scmp.eq.s32.totalorder %s35, 0
      %p193 = por %p191, %p192
      %p194 = scmp.ne.s32.totalorder %s186, %s188
      %p195 = scmp.eq.s32.totalorder %s40, 1
      %p196 = por %p194, %p195
      %p197 = scmp.ne.s32.totalorder %s188, %s189
      %p198 = scmp.eq.s32.totalorder %s40, 0
      %p199 = por %p197, %p198
      %p200 = scmp.ne.s32.totalorder %s188, %s189
      %p201 = scmp.eq.s32.totalorder %s41, 1
      %p202 = por %p200, %p201
      %p204 = scmp.ne.s32.totalorder %s189, %s203
      %p205 = scmp.eq.s32.totalorder %s41, 0
      %p206 = por %p204, %p205
      %s208 = sadd.s32 %s207, 1
      %p211 = scmp.eq.s32.totalorder %s35, 1
      %p212 = scmp.ne.s32.totalorder %s207, %s209
      %p213 = scmp.eq.s32.totalorder %s35, 0
      %p214 = por %p212, %p213
      %p215 = scmp.ne.s32.totalorder %s207, %s209
      %p216 = scmp.eq.s32.totalorder %s40, 1
      %p217 = por %p215, %p216
      %p218 = scmp.ne.s32.totalorder %s209, %s210
      %p219 = scmp.eq.s32.totalorder %s40, 0
      %p220 = por %p218, %p219
      %p221 = scmp.ne.s32.totalorder %s209, %s210
      %p222 = scmp.eq.s32.totalorder %s41, 1
      %p223 = por %p221, %p222
      %p225 = scmp.ne.s32.totalorder %s210, %s224
      %p226 = scmp.eq.s32.totalorder %s41, 0
      %p227 = por %p225, %p226
      %s229 = sadd.s32 %s228, 1
      %p232 = scmp.eq.s32.totalorder %s35, 1
      %p233 = scmp.ne.s32.totalorder %s228, %s230
      %p234 = scmp.eq.s32.totalorder %s35, 0
      %p235 = por %p233, %p234
      %p236 = scmp.ne.s32.totalorder %s228, %s230
      %p237 = scmp.eq.s32.totalorder %s40, 1
      %p238 = por %p236, %p237
      %p239 = scmp.ne.s32.totalorder %s230, %s231
      %p240 = scmp.eq.s32.totalorder %s40, 0
      %p241 = por %p239, %p240
      %p242 = scmp.ne.s32.totalorder %s230, %s231
      %p243 = scmp.eq.s32.totalorder %s41, 1
      %p244 = por %p242, %p243
      %p246 = scmp.ne.s32.totalorder %s231, %s245
      %p247 = scmp.eq.s32.totalorder %s41, 0
      %p248 = por %p246, %p247
      %s250 = sadd.s32 %s249, 1
      %p253 = scmp.eq.s32.totalorder %s35, 1
      %p254 = scmp.ne.s32.totalorder %s249, %s251
      %p255 = scmp.eq.s32.totalorder %s35, 0
      %p256 = por %p254, %p255
      %p257 = scmp.ne.s32.totalorder %s249, %s251
      %p258 = scmp.eq.s32.totalorder %s40, 1
      %p259 = por %p257, %p258
      %p260 = scmp.ne.s32.totalorder %s251, %s252
      %p261 = scmp.eq.s32.totalorder %s40, 0
      %p262 = por %p260, %p261
      %p263 = scmp.ne.s32.totalorder %s251, %s252
      %p264 = scmp.eq.s32.totalorder %s41, 1
      %p265 = por %p263, %p264
      %p267 = scmp.ne.s32.totalorder %s252, %s266
      %p268 = scmp.eq.s32.totalorder %s41, 0
      %p269 = por %p267, %p268
      %s271 = sadd.s32 %s270, 1
      %p274 = scmp.eq.s32.totalorder %s35, 1
      %p275 = scmp.ne.s32.totalorder %s270, %s272
      %p276 = scmp.eq.s32.totalorder %s35, 0
      %p277 = por %p275, %p276
      %p278 = scmp.ne.s32.totalorder %s270, %s272
      %p279 = scmp.eq.s32.totalorder %s40, 1
      %p280 = por %p278, %p279
      %p281 = scmp.ne.s32.totalorder %s272, %s273
      %p282 = scmp.eq.s32.totalorder %s40, 0
      %p283 = por %p281, %p282
      %p284 = scmp.ne.s32.totalorder %s272, %s273
      %p285 = scmp.eq.s32.totalorder %s41, 1
      %p286 = por %p284, %p285
      %p288 = scmp.ne.s32.totalorder %s273, %s287
      %p289 = scmp.eq.s32.totalorder %s41, 0
      %p290 = por %p288, %p289
      %s292 = sadd.s32 %s291, 1
      %p295 = scmp.eq.s32.totalorder %s35, 1
      %p296 = scmp.ne.s32.totalorder %s291, %s293
      %p297 = scmp.eq.s32.totalorder %s35, 0
      %p298 = por %p296, %p297
      %p299 = scmp.ne.s32.totalorder %s291, %s293
      %p300 = scmp.eq.s32.totalorder %s40, 1
      %p301 = por %p299, %p300
      %p302 = scmp.ne.s32.totalorder %s293, %s294
      %p303 = scmp.eq.s32.totalorder %s40, 0
      %p304 = por %p302, %p303
      %p305 = scmp.ne.s32.totalorder %s293, %s294
      %p306 = scmp.eq.s32.totalorder %s41, 1
      %p307 = por %p305, %p306
      %p309 = scmp.ne.s32.totalorder %s294, %s308
      %p310 = scmp.eq.s32.totalorder %s41, 0
      %p311 = por %p309, %p310
      %s313 = sadd.s32 %s312, 1
      %p316 = scmp.eq.s32.totalorder %s35, 1
      %p317 = scmp.ne.s32.totalorder %s312, %s314
      %p318 = scmp.eq.s32.totalorder %s35, 0
      %p319 = por %p317, %p318
      %p320 = scmp.ne.s32.totalorder %s312, %s314
      %p321 = scmp.eq.s32.totalorder %s40, 1
      %p322 = por %p320, %p321
      %p323 = scmp.ne.s32.totalorder %s314, %s315
      %p324 = scmp.eq.s32.totalorder %s40, 0
      %p325 = por %p323, %p324
      %p326 = scmp.ne.s32.totalorder %s314, %s315
      %p327 = scmp.eq.s32.totalorder %s41, 1
      %p328 = por %p326, %p327
      %p330 = scmp.ne.s32.totalorder %s315, %s329
      %p331 = scmp.eq.s32.totalorder %s41, 0
      %p332 = por %p330, %p331
      %s334 = sadd.s32 %s333, 1
      %p337 = scmp.eq.s32.totalorder %s35, 1
      %p338 = scmp.ne.s32.totalorder %s333, %s335
      %p339 = scmp.eq.s32.totalorder %s35, 0
      %p340 = por %p338, %p339
      %p341 = scmp.ne.s32.totalorder %s333, %s335
      %p342 = scmp.eq.s32.totalorder %s40, 1
      %p343 = por %p341, %p342
      %p344 = scmp.ne.s32.totalorder %s335, %s336
      %p345 = scmp.eq.s32.totalorder %s40, 0
      %p346 = por %p344, %p345
      %p347 = scmp.ne.s32.totalorder %s335, %s336
      %p348 = scmp.eq.s32.totalorder %s41, 1
      %p349 = por %p347, %p348
      %p351 = scmp.ne.s32.totalorder %s336, %s350
      %p352 = scmp.eq.s32.totalorder %s41, 0
      %p353 = por %p351, %p352
      %s355 = sadd.s32 %s354, 1
      %p358 = scmp.eq.s32.totalorder %s35, 1
      %p359 = scmp.ne.s32.totalorder %s354, %s356
      %p360 = scmp.eq.s32.totalorder %s35, 0
      %p361 = por %p359, %p360
      %p362 = scmp.ne.s32.totalorder %s354, %s356
      %p363 = scmp.eq.s32.totalorder %s40, 1
      %p364 = por %p362, %p363
      %p365 = scmp.ne.s32.totalorder %s356, %s357
      %p366 = scmp.eq.s32.totalorder %s40, 0
      %p367 = por %p365, %p366
      %p368 = scmp.ne.s32.totalorder %s356, %s357
      %p369 = scmp.eq.s32.totalorder %s41, 1
      %p370 = por %p368, %p369
      %p372 = scmp.ne.s32.totalorder %s357, %s371
      %p373 = scmp.eq.s32.totalorder %s41, 0
      %p374 = por %p372, %p373
      %s376 = sadd.s32 %s375, 1
      %p379 = scmp.eq.s32.totalorder %s35, 1
      %p380 = scmp.ne.s32.totalorder %s375, %s377
      %p381 = scmp.eq.s32.totalorder %s35, 0
      %p382 = por %p380, %p381
      %p383 = scmp.ne.s32.totalorder %s375, %s377
      %p384 = scmp.eq.s32.totalorder %s40, 1
      %p385 = por %p383, %p384
      %p386 = scmp.ne.s32.totalorder %s377, %s378
      %p387 = scmp.eq.s32.totalorder %s40, 0
      %p388 = por %p386, %p387
      %p389 = scmp.ne.s32.totalorder %s377, %s378
      %p390 = scmp.eq.s32.totalorder %s41, 1
      %p391 = por %p389, %p390
      %p393 = scmp.ne.s32.totalorder %s378, %s392
      %p394 = scmp.eq.s32.totalorder %s41, 0
      %p395 = por %p393, %p394
      %s397 = sadd.s32 %s396, 1
      %p400 = scmp.eq.s32.totalorder %s35, 1
      %p401 = scmp.ne.s32.totalorder %s396, %s398
      %p402 = scmp.eq.s32.totalorder %s35, 0
      %p403 = por %p401, %p402
      %p404 = scmp.ne.s32.totalorder %s396, %s398
      %p405 = scmp.eq.s32.totalorder %s40, 1
      %p406 = por %p404, %p405
      %p407 = scmp.ne.s32.totalorder %s398, %s399
      %p408 = scmp.eq.s32.totalorder %s40, 0
      %p409 = por %p407, %p408
      %p410 = scmp.ne.s32.totalorder %s398, %s399
      %p411 = scmp.eq.s32.totalorder %s41, 1
      %p412 = por %p410, %p411
      %p414 = scmp.ne.s32.totalorder %s399, %s413
      %p415 = scmp.eq.s32.totalorder %s41, 0
      %p416 = por %p414, %p415
      %s417 = ssub.s32 %s42, %s54
      %s418 = ssub.s32 %s43, %s50
      %s419 = sor.u32 %s417, %s418
      %p420 = scmp.eq.s32.totalorder %s419, 0
      %s422 = sadd.s32 %s421, 1
      %s423 = scalar_select %p420, %s421, %s422
      %p426 = pneg %p420
      %p427 = scmp.eq.s32.totalorder %s35, 1
      %p428 = por %p426, %p427
      %p429 = scmp.ne.s32.totalorder %s421, %s424
      %p430 = scmp.eq.s32.totalorder %s35, 0
      %p431 = por %p429, %p430
      %p432 = scmp.ne.s32.totalorder %s421, %s424
      %p433 = scmp.eq.s32.totalorder %s40, 1
      %p434 = por %p432, %p433
      %p435 = scmp.ne.s32.totalorder %s424, %s425
      %p436 = scmp.eq.s32.totalorder %s40, 0
      %p437 = por %p435, %p436
      %p438 = scmp.ne.s32.totalorder %s424, %s425
      %p439 = scmp.eq.s32.totalorder %s41, 1
      %p440 = por %p438, %p439
      %p442 = scmp.ne.s32.totalorder %s425, %s441
      %p443 = scmp.eq.s32.totalorder %s41, 0
      %p444 = por %p442, %p443
      %s445 = ssub.s32 %s42, %s54
      %s446 = ssub.s32 %s43, %s50
      %s447 = sor.u32 %s445, %s446
      %p448 = scmp.eq.s32.totalorder %s447, 0
      %s450 = sadd.s32 %s449, 1
      %s451 = scalar_select %p448, %s449, %s450
      %p454 = pneg %p448
      %p455 = scmp.eq.s32.totalorder %s35, 1
      %p456 = por %p454, %p455
      %p457 = scmp.ne.s32.totalorder %s449, %s452
      %p458 = scmp.eq.s32.totalorder %s35, 0
      %p459 = por %p457, %p458
      %p460 = scmp.ne.s32.totalorder %s449, %s452
      %p461 = scmp.eq.s32.totalorder %s40, 1
      %p462 = por %p460, %p461
      %p463 = scmp.ne.s32.totalorder %s452, %s453
      %p464 = scmp.eq.s32.totalorder %s40, 0
      %p465 = por %p463, %p464
      %p466 = scmp.ne.s32.totalorder %s452, %s453
      %p467 = scmp.eq.s32.totalorder %s41, 1
      %p468 = por %p466, %p467
      %p470 = scmp.ne.s32.totalorder %s453, %s469
      %p471 = scmp.eq.s32.totalorder %s41, 0
      %p472 = por %p470, %p471
      %p473 = scmp.le.s32.totalorder 1, %s35
      %p474 = scmp.lt.s32.totalorder %s35, 3
      %p475 = pnand %p473, %p474
      %p476 = pneg %p475
      // Predicated region
      $region9: #{tpu_custom_call.1} parent=5 // pred_check
        _
      $region10: #{tpu_custom_call.1} parent=5 // pred_check_branch
        %478 = sbr.rel (%p475) target = $region12
      $region11: #{tpu_custom_call.1} parent=5 // pred_region
        %s479 = ssub.s32 %s35, 1
        // Predicated region
        $region13: #{tpu_custom_call.1} parent=11 // pred_check
          %p480 = pneg %p94
        $region14: #{tpu_custom_call.1} parent=11 // pred_check_branch
          %482 = sbr.rel (%p480) target = $region16
        $region15: #{tpu_custom_call.1} parent=11 // pred_region
          %484 = vsyncadd [#allocation11], 0
          %s486 = sshll.u32 %s1, 4
          %s487 = int_to_ptr.hbm [resolvable:$true] %s486
          %s488 = sshll.u32 [#allocation10], 4
          %s489 = int_to_ptr.vmem [resolvable:$true] %s488
          %491 = dma.hbm_to_vmem [thread:$0]  %s487, 16, %s489, [#allocation11]
        $region16: #{tpu_custom_call.1} parent=11 // pred_fallthru
          _
        // Predicated region
        $region17: #{tpu_custom_call.1} parent=11 // pred_check
          %p492 = pneg %p115
        $region18: #{tpu_custom_call.1} parent=11 // pred_check_branch
          %494 = sbr.rel (%p492) target = $region20
        $region19: #{tpu_custom_call.1} parent=11 // pred_region
          _
        $region20: #{tpu_custom_call.1} parent=11 // pred_fallthru
          _
        // Predicated region
        $region21: #{tpu_custom_call.1} parent=11 // pred_check
          %p495 = pneg %p136
        $region22: #{tpu_custom_call.1} parent=11 // pred_check_branch
          %497 = sbr.rel (%p495) target = $region24
        $region23: #{tpu_custom_call.1} parent=11 // pred_region
          _
        $region24: #{tpu_custom_call.1} parent=11 // pred_fallthru
          _
        // Predicated region
        $region25: #{tpu_custom_call.1} parent=11 // pred_check
          %p498 = pneg %p157
        $region26: #{tpu_custom_call.1} parent=11 // pred_check_branch
          %500 = sbr.rel (%p498) target = $region28
        $region27: #{tpu_custom_call.1} parent=11 // pred_region
          _
        $region28: #{tpu_custom_call.1} parent=11 // pred_fallthru
          _
        // Predicated region
        $region29: #{tpu_custom_call.1} parent=11 // pred_check
          %p501 = pneg %p178
        $region30: #{tpu_custom_call.1} parent=11 // pred_check_branch
          %503 = sbr.rel (%p501) target = $region32
        $region31: #{tpu_custom_call.1} parent=11 // pred_region
          _
        $region32: #{tpu_custom_call.1} parent=11 // pred_fallthru
          _
        // Predicated region
        $region33: #{tpu_custom_call.1} parent=11 // pred_check
          %p504 = pneg %p199
        $region34: #{tpu_custom_call.1} parent=11 // pred_check_branch
          %506 = sbr.rel (%p504) target = $region36
        $region35: #{tpu_custom_call.1} parent=11 // pred_region
          _
        $region36: #{tpu_custom_call.1} parent=11 // pred_fallthru
          _
        // Predicated region
        $region37: #{tpu_custom_call.1} parent=11 // pred_check
          %p507 = pneg %p220
        $region38: #{tpu_custom_call.1} parent=11 // pred_check_branch
          %509 = sbr.rel (%p507) target = $region40
        $region39: #{tpu_custom_call.1} parent=11 // pred_region
          _
        $region40: #{tpu_custom_call.1} parent=11 // pred_fallthru
          _
        // Predicated region
        $region41: #{tpu_custom_call.1} parent=11 // pred_check
          %p510 = pneg %p241
        $region42: #{tpu_custom_call.1} parent=11 // pred_check_branch
          %512 = sbr.rel (%p510) target = $region44
        $region43: #{tpu_custom_call.1} parent=11 // pred_region
          _
        $region44: #{tpu_custom_call.1} parent=11 // pred_fallthru
          _
        // Predicated region
        $region45: #{tpu_custom_call.1} parent=11 // pred_check
          %p513 = pneg %p262
        $region46: #{tpu_custom_call.1} parent=11 // pred_check_branch
          %515 = sbr.rel (%p513) target = $region48
        $region47: #{tpu_custom_call.1} parent=11 // pred_region
          _
        $region48: #{tpu_custom_call.1} parent=11 // pred_fallthru
          _
        // Predicated region
        $region49: #{tpu_custom_call.1} parent=11 // pred_check
          %p516 = pneg %p283
        $region50: #{tpu_custom_call.1} parent=11 // pred_check_branch
          %518 = sbr.rel (%p516) target = $region52
        $region51: #{tpu_custom_call.1} parent=11 // pred_region
          _
        $region52: #{tpu_custom_call.1} parent=11 // pred_fallthru
          _
        // Predicated region
        $region53: #{tpu_custom_call.1} parent=11 // pred_check
          %p519 = pneg %p304
        $region54: #{tpu_custom_call.1} parent=11 // pred_check_branch
          %521 = sbr.rel (%p519) target = $region56
        $region55: #{tpu_custom_call.1} parent=11 // pred_region
          _
        $region56: #{tpu_custom_call.1} parent=11 // pred_fallthru
          _
        // Predicated region
        $region57: #{tpu_custom_call.1} parent=11 // pred_check
          %p522 = pneg %p325
        $region58: #{tpu_custom_call.1} parent=11 // pred_check_branch
          %524 = sbr.rel (%p522) target = $region60
        $region59: #{tpu_custom_call.1} parent=11 // pred_region
          _
        $region60: #{tpu_custom_call.1} parent=11 // pred_fallthru
          _
        // Predicated region
        $region61: #{tpu_custom_call.1} parent=11 // pred_check
          %p525 = pneg %p346
        $region62: #{tpu_custom_call.1} parent=11 // pred_check_branch
          %527 = sbr.rel (%p525) target = $region64
        $region63: #{tpu_custom_call.1} parent=11 // pred_region
          _
        $region64: #{tpu_custom_call.1} parent=11 // pred_fallthru
          _
        // Predicated region
        $region65: #{tpu_custom_call.1} parent=11 // pred_check
          %p528 = pneg %p367
        $region66: #{tpu_custom_call.1} parent=11 // pred_check_branch
          %530 = sbr.rel (%p528) target = $region68
        $region67: #{tpu_custom_call.1} parent=11 // pred_region
          _
        $region68: #{tpu_custom_call.1} parent=11 // pred_fallthru
          _
        // Predicated region
        $region69: #{tpu_custom_call.1} parent=11 // pred_check
          %p531 = pneg %p388
        $region70: #{tpu_custom_call.1} parent=11 // pred_check_branch
          %533 = sbr.rel (%p531) target = $region72
        $region71: #{tpu_custom_call.1} parent=11 // pred_region
          _
        $region72: #{tpu_custom_call.1} parent=11 // pred_fallthru
          _
        // Predicated region
        $region73: #{tpu_custom_call.1} parent=11 // pred_check
          %p534 = pneg %p409
        $region74: #{tpu_custom_call.1} parent=11 // pred_check_branch
          %536 = sbr.rel (%p534) target = $region76
        $region75: #{tpu_custom_call.1} parent=11 // pred_region
          _
        $region76: #{tpu_custom_call.1} parent=11 // pred_fallthru
          _
      $region12: #{tpu_custom_call.1} parent=5 // pred_fallthru
        _
      %p537 = scmp.lt.s32.totalorder %s35, 2
      // Predicated region
      $region77: #{tpu_custom_call.1} parent=5 // pred_check
        %p538 = pneg %p537
      $region78: #{tpu_custom_call.1} parent=5 // pred_check_branch
        %540 = sbr.rel (%p538) target = $region80
      $region79: #{tpu_custom_call.1} parent=5 // pred_region
        // Predicated region
        $region81: #{tpu_custom_call.1} parent=79 // pred_check
          %p541 = pneg %p67
        $region82: #{tpu_custom_call.1} parent=79 // pred_check_branch
          %543 = sbr.rel (%p541) target = $region84
        $region83: #{tpu_custom_call.1} parent=79 // pred_region
          %s544 = sand.u32 %s57, 1
          %s545 = scalar_lea.sflag [#allocation8], %s544
          %s546 = sand.u32 %s57, 1
          %s547 = smul.addr %s546, 8
          %s548 = scalar_lea.vmem [#allocation7], %s547
          %550 = vsyncadd %s545, 0
          %s551 = smul.addr %s42, 8
          %s552 = scalar_lea.hbm %s0, %s551
          %s554 = sshll.u32 %s552, 4
          %s555 = int_to_ptr.hbm [resolvable:$true] %s554
          %s556 = sshll.u32 %s548, 4
          %s557 = int_to_ptr.vmem [resolvable:$true] %s556
          %559 = dma.hbm_to_vmem [thread:$0]  %s555, 128, %s557, %s545
        $region84: #{tpu_custom_call.1} parent=79 // pred_fallthru
          _
      $region80: #{tpu_custom_call.1} parent=5 // pred_fallthru
        _
      %p560 = scmp.le.s32.totalorder 1, %s35
      %p561 = scmp.lt.s32.totalorder %s35, 3
      %p562 = pnand %p560, %p561
      %p563 = pneg %p562
      // Predicated region
      $region85: #{tpu_custom_call.1} parent=5 // pred_check
        _
      $region86: #{tpu_custom_call.1} parent=5 // pred_check_branch
        %565 = sbr.rel (%p562) target = $region88
      $region87: #{tpu_custom_call.1} parent=5 // pred_region
        %s566 = ssub.s32 %s35, 1
        %s567 = sand.u32 %s60, 1
        %s568 = scalar_lea.sflag [#allocation8], %s567
        %s569 = sand.u32 %s60, 1
        %s570 = smul.addr %s569, 8
        %s571 = scalar_lea.vmem [#allocation7], %s570
        // Predicated region
        $region89: #{tpu_custom_call.1} parent=87 // pred_check
          %p572 = pneg %p73
        $region90: #{tpu_custom_call.1} parent=87 // pred_check_branch
          %574 = sbr.rel (%p572) target = $region92
        $region91: #{tpu_custom_call.1} parent=87 // pred_region
          %576 = dma.done %s568, 128
        $region92: #{tpu_custom_call.1} parent=87 // pred_fallthru
          _
        // Predicated region
        $region93: #{tpu_custom_call.1} parent=87 // pred_check
          %p577 = pneg %p94
        $region94: #{tpu_custom_call.1} parent=87 // pred_check_branch
          %579 = sbr.rel (%p577) target = $region96
        $region95: #{tpu_custom_call.1} parent=87 // pred_region
          %581 = dma.done [#allocation11], 16
        $region96: #{tpu_custom_call.1} parent=87 // pred_fallthru
          _
        %s582 = sand.u32 %s60, 1
        %s583 = scalar_lea.sflag [#allocation8], %s582
        %s584 = sand.u32 %s60, 1
        %s585 = smul.addr %s584, 8
        %s586 = scalar_lea.vmem [#allocation7], %s585
        %p587 = pneg %p73
        %p588 = pneg %p70
        %p589 = pneg %p94
        %p590 = pneg %p91
        %p591 = pneg %p115
        %p592 = pneg %p112
        %p593 = pneg %p136
        %p594 = pneg %p133
        %p595 = pneg %p157
        %p596 = pneg %p154
        %p597 = pneg %p178
        %p598 = pneg %p175
        %p599 = pneg %p199
        %p600 = pneg %p196
        %p601 = pneg %p220
        %p602 = pneg %p217
        %p603 = pneg %p241
        %p604 = pneg %p238
        %p605 = pneg %p262
        %p606 = pneg %p259
        %p607 = pneg %p283
        %p608 = pneg %p280
        %p609 = pneg %p304
        %p610 = pneg %p301
        %p611 = pneg %p325
        %p612 = pneg %p322
        %p613 = pneg %p346
        %p614 = pneg %p343
        %p615 = pneg %p367
        %p616 = pneg %p364
        %p617 = pneg %p388
        %p618 = pneg %p385
        %p619 = pneg %p409
        %p620 = pneg %p406
        %p621 = pneg %p437
        %p622 = pneg %p434
        %s623 = sand.u32 %s424, 1
        %s624 = scalar_lea.sflag [#allocation9], %s623
        %s625 = sand.u32 %s424, 1
        %s626 = smul.addr %s625, 8
        %s627 = scalar_lea.vmem [#allocation12], %s626
        %p628 = pneg %p465
        %p629 = pneg %p462
        %s630 = sand.u32 %s452, 1
        %s631 = scalar_lea.sflag [#allocation14], %s630
        %s632 = sand.u32 %s452, 1
        %s633 = smul.addr %s632, 8
        %s634 = scalar_lea.vmem [#allocation13], %s633
        %p635 = scmp.eq.s32.totalorder %s45, 0
        // Predicated region
        $region97: #{tpu_custom_call.1} parent=87 // pred_check
          %p636 = pneg %p635
        $region98: #{tpu_custom_call.1} parent=87 // pred_check_branch
          %638 = sbr.rel (%p636) target = $region100
        $region99: #{tpu_custom_call.1} parent=87 // pred_region
          %v639 = vld [vmem:[%s571] sm:$0xff]
          %vm640 = vcmask 261120
          %v641 = vsel %vm640, %v639, 0.0
          %642 = vadd.xlane.f32.xlu0 %v641
          %v643 = vpop.xlane.xlu0 %642
          %v644 = vrcp.pop 32.0
          %v645 = vmul.f32 32.0, %v644
          %v646 = vsub.f32 1.0, %v645
          %v647 = vmul.f32 %v644, %v646
          %v648 = vadd.f32 %v644, %v647
          %vm649 = vweird.f32 %v644
          %v650 = vsel %vm649, %v644, %v648
          %v651 = vmul.f32 %v643, %v650
          %v652 = vsub.f32 %v639, %v651
          %v653 = vmul.f32 %v652, %v652
          %v654 = vsel %vm640, %v653, 0.0
          %655 = vadd.xlane.f32.xlu0 %v654
          %v656 = vpop.xlane.xlu0 %655
          %v657 = vmul.f32 %v656, %v650
          %v658 = vadd.f32 %v657, 1e-05
          %v659 = vrsqrt.pop %v658
          %v660 = vmul.f32 %v659, %v658
          %v661 = vmul.f32 %v660, %v659
          %v662 = vmul.f32 0.5, %v661
          %v663 = vsub.f32 1.5, %v662
          %v664 = vmul.f32 %v659, %v663
          %vm665 = vweird.f32 %v658
          %vm666 = vweird.f32 %v659
          %vm667 = vmor %vm665, %vm666
          %v668 = vsel %vm667, %v659, %v664
          %v669 = vmul.f32 %v652, %v668
          %v670 = vld [vmem:[#allocation10] sm:$0x1]
          %v672 = vperm.slane %v670, 0
          %v674 = vmul.f32 %v669, %v672
          %v675 = vld [vmem:[%s2] sm:$0x1]
          %v677 = vperm.slane %v675, 0
          %v679 = vadd.f32 %v674, %v677
          %680 = vst.msk [vmem:[#allocation2] sm:$0xff] %vm640, %v679
          %v681 = vld [vmem:[%s5] sm:$0xff]
          %v682 = vld [vmem:[%s5 + $0x8] sm:$0xff]
          %v683 = vld [vmem:[%s5 + $0x10] sm:$0xff]
          %v684 = vld [vmem:[%s5 + $0x18] sm:$0xff]
          %v685 = vld [vmem:[%s6] sm:$0x1]
          %v687 = vperm.slane %v685, 0
          %v690 = vsel %vm640, %v679, 0
          %692 = vmatpush.msra.mxu0 0.0
          %693 = vmatpush.msra.mxu0 0.0
          %694 = vmatpush.msra.mxu0 0.0
          %695 = vmatpush.msra.mxu0 0.0
          %696 = vmatpush.msra.mxu0 0.0
          %697 = vmatpush.msra.mxu0 0.0
          %698 = vmatpush.msra.mxu0 0.0
          %699 = vmatpush.msra.mxu0 0.0
          %700 = vmatpush.msra.mxu0 0.0
          %701 = vmatpush.msra.mxu0 0.0
          %702 = vmatpush.msra.mxu0 0.0
          %703 = vmatpush.msra.mxu0 0.0
          %704 = vmatpush.msra.mxu0 %v684
          %705 = vmatpush.msra.mxu0 %v683
          %706 = vmatpush.msra.mxu0 %v682
          %707 = vmatpush.msra.mxu0 %v681
          %708 = vmatmul.f32.gmra.mxu0 %v690
          %v709 = vpop.f32.mrf.mxu0
          %v710 = vadd.f32 %v687, %v709
          %711 = vdwg.mxu0
          %712 = vst.msk [vmem:[#allocation3] sm:$0xff] %vm640, %v710
          %v713 = vld [vmem:[%s7] sm:$0xff]
          %v714 = vld [vmem:[%s7 + $0x8] sm:$0xff]
          %v715 = vld [vmem:[%s7 + $0x10] sm:$0xff]
          %v716 = vld [vmem:[%s7 + $0x18] sm:$0xff]
          %v717 = vld [vmem:[%s8] sm:$0x1]
          %v719 = vperm.slane %v717, 0
          %721 = vmatpush.msra.mxu0 0.0
          %722 = vmatpush.msra.mxu0 0.0
          %723 = vmatpush.msra.mxu0 0.0
          %724 = vmatpush.msra.mxu0 0.0
          %725 = vmatpush.msra.mxu0 0.0
          %726 = vmatpush.msra.mxu0 0.0
          %727 = vmatpush.msra.mxu0 0.0
          %728 = vmatpush.msra.mxu0 0.0
          %729 = vmatpush.msra.mxu0 0.0
          %730 = vmatpush.msra.mxu0 0.0
          %731 = vmatpush.msra.mxu0 0.0
          %732 = vmatpush.msra.mxu0 0.0
          %733 = vmatpush.msra.mxu0 %v716
          %734 = vmatpush.msra.mxu0 %v715
          %735 = vmatpush.msra.mxu0 %v714
          %736 = vmatpush.msra.mxu0 %v713
          %737 = vmatmul.f32.gmra.mxu0 %v690
          %v738 = vpop.f32.mrf.mxu0
          %v739 = vadd.f32 %v719, %v738
          %740 = vdwg.mxu0
          %741 = vst.msk [vmem:[#allocation4] sm:$0xff] %vm640, %v739
        $region100: #{tpu_custom_call.1} parent=87 // pred_fallthru
          _
        %s742 = smul.u32 %s45, 8
        %s743 = scalar_lea.vmem [#allocation2], %s742
        %v744 = vld [vmem:[%s743] sm:$0xff]
        %v745 = vld [vmem:[%s3] sm:$0xff]
        %v746 = vld [vmem:[%s3 + $0x8] sm:$0xff]
        %v747 = vld [vmem:[%s3 + $0x10] sm:$0xff]
        %v748 = vld [vmem:[%s3 + $0x18] sm:$0xff]
        %v749 = vld [vmem:[%s4] sm:$0x1]
        %v751 = vperm.slane %v749, 0
        %vm753 = vcmask 261120
        %v755 = vsel %vm753, %v744, 0
        %757 = vmatpush.msra.mxu0 0.0
        %758 = vmatpush.msra.mxu0 0.0
        %759 = vmatpush.msra.mxu0 0.0
        %760 = vmatpush.msra.mxu0 0.0
        %761 = vmatpush.msra.mxu0 0.0
        %762 = vmatpush.msra.mxu0 0.0
        %763 = vmatpush.msra.mxu0 0.0
        %764 = vmatpush.msra.mxu0 0.0
        %765 = vmatpush.msra.mxu0 0.0
        %766 = vmatpush.msra.mxu0 0.0
        %767 = vmatpush.msra.mxu0 0.0
        %768 = vmatpush.msra.mxu0 0.0
        %769 = vmatpush.msra.mxu0 %v748
        %770 = vmatpush.msra.mxu0 %v747
        %771 = vmatpush.msra.mxu0 %v746
        %772 = vmatpush.msra.mxu0 %v745
        %773 = vmatmul.f32.gmra.mxu0 %v755
        %v774 = vpop.f32.mrf.mxu0
        %v775 = vadd.f32 %v751, %v774
        %776 = vdwg.mxu0
        %777 = vst.msk [vmem:[#allocation5] sm:$0xff] %vm753, %v775
        %v778 = vld [vmem:[#allocation5] sm:$0xff]
        %v779 = vld [vmem:[#allocation3] sm:$0xff]
        %vm780 = vcmask 64512
        %v782 = vsel %vm780, %v778, 0
        %v785 = vsel %vm780, %v779, 0
        %787 = vmatpush.xpose.msra.mxu0 0.0
        %788 = vmatpush.xpose.msra.mxu0 0.0
        %789 = vmatpush.xpose.msra.mxu0 0.0
        %790 = vmatpush.xpose.msra.mxu0 0.0
        %791 = vmatpush.xpose.msra.mxu0 0.0
        %792 = vmatpush.xpose.msra.mxu0 0.0
        %793 = vmatpush.xpose.msra.mxu0 0.0
        %794 = vmatpush.xpose.msra.mxu0 0.0
        %795 = vmatpush.xpose.msra.mxu0 0.0
        %796 = vmatpush.xpose.msra.mxu0 0.0
        %797 = vmatpush.xpose.msra.mxu0 0.0
        %798 = vmatpush.xpose.msra.mxu0 0.0
        %799 = vmatpush.xpose.msra.mxu0 0.0
        %800 = vmatpush.xpose.msra.mxu0 0.0
        %801 = vmatpush.xpose.msra.mxu0 0.0
        %802 = vmatpush.xpose.msra.mxu0 %v785
        %803 = vmatmul.f32.gmra.mxu0 %v782
        %v804 = vpop.f32.mrf.mxu0
        %v805 = vadd.f32 0.0, %v804
        %806 = vdwg.mxu0
        %v807 = vsel %vm780, %v805, -inf
        %808 = vmax.xlane.f32.xlu0 %v807
        %v809 = vpop.xlane.xlu0 %808
        %v810 = vsub.f32 %v805, %v809
        %v811 = vmul.f32 %v810, 1.442695
        %v812 = vpow.pop %v811
        %v813 = vsel %vm780, %v812, 0.0
        %814 = vadd.xlane.f32.xlu0 %v813
        %v815 = vpop.xlane.xlu0 %814
        %v816 = vrcp.pop %v815
        %v817 = vmul.f32 %v815, %v816
        %v818 = vsub.f32 1.0, %v817
        %v819 = vmul.f32 %v816, %v818
        %v820 = vadd.f32 %v816, %v819
        %vm821 = vweird.f32 %v815
        %vm822 = vweird.f32 %v816
        %vm823 = vmor %vm821, %vm822
        %v824 = vsel %vm823, %v816, %v820
        %v825 = vand.u32 2147483647, %v815
        %vm826 = vcmp.eq.f32.partialorder %v825, 8.507059e+37
        %v827 = vand.u32 %v815, 2147483648
        %v828 = vor.u32 1.1754944e-38, %v827
        %v829 = vsel %vm826, %v828, %v824
        %v830 = vmul.f32 %v812, %v829
        %831 = vst.msk [vmem:[%s634] sm:$0xff] %vm780, %v830
        %v832 = vld [vmem:[#allocation4] sm:$0xff]
        %v834 = vsel %vm780, %v830, 0
        %836 = vmatpush.msra.mxu0 0.0
        %837 = vmatpush.msra.mxu0 0.0
        %838 = vmatpush.msra.mxu0 0.0
        %839 = vmatpush.msra.mxu0 0.0
        %840 = vmatpush.msra.mxu0 0.0
        %841 = vmatpush.msra.mxu0 0.0
        %842 = vmatpush.msra.mxu0 0.0
        %843 = vmatpush.msra.mxu0 0.0
        %844 = vmatpush.msra.mxu0 0.0
        %845 = vmatpush.msra.mxu0 0.0
        %846 = vmatpush.msra.mxu0 0.0
        %847 = vmatpush.msra.mxu0 0.0
        %848 = vmatpush.msra.mxu0 0.0
        %849 = vmatpush.msra.mxu0 0.0
        %850 = vmatpush.msra.mxu0 0.0
        %851 = vmatpush.msra.mxu0 %v832
        %852 = vmatmul.f32.gmra.mxu0 %v834
        %v853 = vpop.f32.mrf.mxu0
        %v854 = vadd.f32 0.0, %v853
        %855 = vdwg.mxu0
        %v856 = vld [vmem:[%s9] sm:$0xff]
        %v858 = vsel %vm780, %v854, 0
        %860 = vmatpush.msra.mxu0 0.0
        %861 = vmatpush.msra.mxu0 0.0
        %862 = vmatpush.msra.mxu0 0.0
        %863 = vmatpush.msra.mxu0 0.0
        %864 = vmatpush.msra.mxu0 0.0
        %865 = vmatpush.msra.mxu0 0.0
        %866 = vmatpush.msra.mxu0 0.0
        %867 = vmatpush.msra.mxu0 0.0
        %868 = vmatpush.msra.mxu0 0.0
        %869 = vmatpush.msra.mxu0 0.0
        %870 = vmatpush.msra.mxu0 0.0
        %871 = vmatpush.msra.mxu0 0.0
        %872 = vmatpush.msra.mxu0 0.0
        %873 = vmatpush.msra.mxu0 0.0
        %874 = vmatpush.msra.mxu0 0.0
        %875 = vmatpush.msra.mxu0 %v856
        %876 = vmatmul.f32.gmra.mxu0 %v858
        %v877 = vpop.f32.mrf.mxu0
        %v878 = vadd.f32 0.0, %v877
        %879 = vdwg.mxu0
        %880 = vst.msk [vmem:[#allocation6] sm:$0xff] %vm753, %v878
        %v881 = vld [vmem:[#allocation5] sm:$0xff]
        %v882 = vld [vmem:[#allocation3] sm:$0xff]
        %884 = vrot.lane.b32.xlu0 %v881, 120
        %v885 = vpop.permute.xlu0 %884
        %887 = vrot.lane.b32.xlu0 %v882, 120
        %v888 = vpop.permute.xlu0 %887
        %v889 = vsel %vm780, %v885, 0
        %v891 = vsel %vm780, %v888, 0
        %893 = vmatpush.xpose.msra.mxu0 0.0
        %894 = vmatpush.xpose.msra.mxu0 0.0
        %895 = vmatpush.xpose.msra.mxu0 0.0
        %896 = vmatpush.xpose.msra.mxu0 0.0
        %897 = vmatpush.xpose.msra.mxu0 0.0
        %898 = vmatpush.xpose.msra.mxu0 0.0
        %899 = vmatpush.xpose.msra.mxu0 0.0
        %900 = vmatpush.xpose.msra.mxu0 0.0
        %901 = vmatpush.xpose.msra.mxu0 0.0
        %902 = vmatpush.xpose.msra.mxu0 0.0
        %903 = vmatpush.xpose.msra.mxu0 0.0
        %904 = vmatpush.xpose.msra.mxu0 0.0
        %905 = vmatpush.xpose.msra.mxu0 0.0
        %906 = vmatpush.xpose.msra.mxu0 0.0
        %907 = vmatpush.xpose.msra.mxu0 0.0
        %908 = vmatpush.xpose.msra.mxu0 %v891
        %909 = vmatmul.f32.gmra.mxu0 %v889
        %v910 = vpop.f32.mrf.mxu0
        %v911 = vadd.f32 0.0, %v910
        %912 = vdwg.mxu0
        %v913 = vsel %vm780, %v911, -inf
        %914 = vmax.xlane.f32.xlu0 %v913
        %v915 = vpop.xlane.xlu0 %914
        %v916 = vsub.f32 %v911, %v915
        %v917 = vmul.f32 %v916, 1.442695
        %v918 = vpow.pop %v917
        %v919 = vsel %vm780, %v918, 0.0
        %920 = vadd.xlane.f32.xlu0 %v919
        %v921 = vpop.xlane.xlu0 %920
        %v922 = vrcp.pop %v921
        %v923 = vmul.f32 %v921, %v922
        %v924 = vsub.f32 1.0, %v923
        %v925 = vmul.f32 %v922, %v924
        %v926 = vadd.f32 %v922, %v925
        %vm927 = vweird.f32 %v921
        %vm928 = vweird.f32 %v922
        %vm929 = vmor %vm927, %vm928
        %v930 = vsel %vm929, %v922, %v926
        %v931 = vand.u32 2147483647, %v921
        %vm932 = vcmp.eq.f32.partialorder %v931, 8.507059e+37
        %v933 = vand.u32 %v921, 2147483648
        %v934 = vor.u32 1.1754944e-38, %v933
        %v935 = vsel %vm932, %v934, %v930
        %v936 = vmul.f32 %v918, %v935
        %v937 = vld [vmem:[%s634] sm:$0xff]
        %v938 = vadd.f32 %v937, %v936
        %939 = vst.msk [vmem:[%s634] sm:$0xff] %vm780, %v938
        %v940 = vld [vmem:[#allocation4] sm:$0xff]
        %942 = vrot.lane.b32.xlu0 %v940, 120
        %v943 = vpop.permute.xlu0 %942
        %v946 = vsel %vm780, %v936, 0
        %948 = vmatpush.msra.mxu0 0.0
        %949 = vmatpush.msra.mxu0 0.0
        %950 = vmatpush.msra.mxu0 0.0
        %951 = vmatpush.msra.mxu0 0.0
        %952 = vmatpush.msra.mxu0 0.0
        %953 = vmatpush.msra.mxu0 0.0
        %954 = vmatpush.msra.mxu0 0.0
        %955 = vmatpush.msra.mxu0 0.0
        %956 = vmatpush.msra.mxu0 0.0
        %957 = vmatpush.msra.mxu0 0.0
        %958 = vmatpush.msra.mxu0 0.0
        %959 = vmatpush.msra.mxu0 0.0
        %960 = vmatpush.msra.mxu0 0.0
        %961 = vmatpush.msra.mxu0 0.0
        %962 = vmatpush.msra.mxu0 0.0
        %963 = vmatpush.msra.mxu0 %v943
        %964 = vmatmul.f32.gmra.mxu0 %v946
        %v965 = vpop.f32.mrf.mxu0
        %v966 = vadd.f32 0.0, %v965
        %967 = vdwg.mxu0
        %v968 = vld [vmem:[%s9 + $0x8] sm:$0xff]
        %v970 = vsel %vm780, %v966, 0
        %972 = vmatpush.msra.mxu0 0.0
        %973 = vmatpush.msra.mxu0 0.0
        %974 = vmatpush.msra.mxu0 0.0
        %975 = vmatpush.msra.mxu0 0.0
        %976 = vmatpush.msra.mxu0 0.0
        %977 = vmatpush.msra.mxu0 0.0
        %978 = vmatpush.msra.mxu0 0.0
        %979 = vmatpush.msra.mxu0 0.0
        %980 = vmatpush.msra.mxu0 0.0
        %981 = vmatpush.msra.mxu0 0.0
        %982 = vmatpush.msra.mxu0 0.0
        %983 = vmatpush.msra.mxu0 0.0
        %984 = vmatpush.msra.mxu0 0.0
        %985 = vmatpush.msra.mxu0 0.0
        %986 = vmatpush.msra.mxu0 0.0
        %987 = vmatpush.msra.mxu0 %v968
        %988 = vmatmul.f32.gmra.mxu0 %v970
        %v989 = vpop.f32.mrf.mxu0
        %v990 = vadd.f32 0.0, %v989
        %991 = vdwg.mxu0
        %v992 = vld [vmem:[#allocation6] sm:$0xff]
        %v993 = vadd.f32 %v992, %v990
        %994 = vst.msk [vmem:[#allocation6] sm:$0xff] %vm753, %v993
        %v995 = vld [vmem:[#allocation5] sm:$0xff]
        %v996 = vld [vmem:[#allocation3] sm:$0xff]
        %998 = vrot.lane.b32.xlu0 %v995, 112
        %v999 = vpop.permute.xlu0 %998
        %1001 = vrot.lane.b32.xlu0 %v996, 112
        %v1002 = vpop.permute.xlu0 %1001
        %v1003 = vsel %vm780, %v999, 0
        %v1005 = vsel %vm780, %v1002, 0
        %1007 = vmatpush.xpose.msra.mxu0 0.0
        %1008 = vmatpush.xpose.msra.mxu0 0.0
        %1009 = vmatpush.xpose.msra.mxu0 0.0
        %1010 = vmatpush.xpose.msra.mxu0 0.0
        %1011 = vmatpush.xpose.msra.mxu0 0.0
        %1012 = vmatpush.xpose.msra.mxu0 0.0
        %1013 = vmatpush.xpose.msra.mxu0 0.0
        %1014 = vmatpush.xpose.msra.mxu0 0.0
        %1015 = vmatpush.xpose.msra.mxu0 0.0
        %1016 = vmatpush.xpose.msra.mxu0 0.0
        %1017 = vmatpush.xpose.msra.mxu0 0.0
        %1018 = vmatpush.xpose.msra.mxu0 0.0
        %1019 = vmatpush.xpose.msra.mxu0 0.0
        %1020 = vmatpush.xpose.msra.mxu0 0.0
        %1021 = vmatpush.xpose.msra.mxu0 0.0
        %1022 = vmatpush.xpose.msra.mxu0 %v1005
        %1023 = vmatmul.f32.gmra.mxu0 %v1003
        %v1024 = vpop.f32.mrf.mxu0
        %v1025 = vadd.f32 0.0, %v1024
        %1026 = vdwg.mxu0
        %v1027 = vsel %vm780, %v1025, -inf
        %1028 = vmax.xlane.f32.xlu0 %v1027
        %v1029 = vpop.xlane.xlu0 %1028
        %v1030 = vsub.f32 %v1025, %v1029
        %v1031 = vmul.f32 %v1030, 1.442695
        %v1032 = vpow.pop %v1031
        %v1033 = vsel %vm780, %v1032, 0.0
        %1034 = vadd.xlane.f32.xlu0 %v1033
        %v1035 = vpop.xlane.xlu0 %1034
        %v1036 = vrcp.pop %v1035
        %v1037 = vmul.f32 %v1035, %v1036
        %v1038 = vsub.f32 1.0, %v1037
        %v1039 = vmul.f32 %v1036, %v1038
        %v1040 = vadd.f32 %v1036, %v1039
        %vm1041 = vweird.f32 %v1035
        %vm1042 = vweird.f32 %v1036
        %vm1043 = vmor %vm1041, %vm1042
        %v1044 = vsel %vm1043, %v1036, %v1040
        %v1045 = vand.u32 2147483647, %v1035
        %vm1046 = vcmp.eq.f32.partialorder %v1045, 8.507059e+37
        %v1047 = vand.u32 %v1035, 2147483648
        %v1048 = vor.u32 1.1754944e-38, %v1047
        %v1049 = vsel %vm1046, %v1048, %v1044
        %v1050 = vmul.f32 %v1032, %v1049
        %v1051 = vld [vmem:[%s634] sm:$0xff]
        %v1052 = vadd.f32 %v1051, %v1050
        %1053 = vst.msk [vmem:[%s634] sm:$0xff] %vm780, %v1052
        %v1054 = vld [vmem:[#allocation4] sm:$0xff]
        %1056 = vrot.lane.b32.xlu0 %v1054, 112
        %v1057 = vpop.permute.xlu0 %1056
        %v1060 = vsel %vm780, %v1050, 0
        %1062 = vmatpush.msra.mxu0 0.0
        %1063 = vmatpush.msra.mxu0 0.0
        %1064 = vmatpush.msra.mxu0 0.0
        %1065 = vmatpush.msra.mxu0 0.0
        %1066 = vmatpush.msra.mxu0 0.0
        %1067 = vmatpush.msra.mxu0 0.0
        %1068 = vmatpush.msra.mxu0 0.0
        %1069 = vmatpush.msra.mxu0 0.0
        %1070 = vmatpush.msra.mxu0 0.0
        %1071 = vmatpush.msra.mxu0 0.0
        %1072 = vmatpush.msra.mxu0 0.0
        %1073 = vmatpush.msra.mxu0 0.0
        %1074 = vmatpush.msra.mxu0 0.0
        %1075 = vmatpush.msra.mxu0 0.0
        %1076 = vmatpush.msra.mxu0 0.0
        %1077 = vmatpush.msra.mxu0 %v1057
        %1078 = vmatmul.f32.gmra.mxu0 %v1060
        %v1079 = vpop.f32.mrf.mxu0
        %v1080 = vadd.f32 0.0, %v1079
        %1081 = vdwg.mxu0
        %v1082 = vld [vmem:[%s9 + $0x10] sm:$0xff]
        %v1084 = vsel %vm780, %v1080, 0
        %1086 = vmatpush.msra.mxu0 0.0
        %1087 = vmatpush.msra.mxu0 0.0
        %1088 = vmatpush.msra.mxu0 0.0
        %1089 = vmatpush.msra.mxu0 0.0
        %1090 = vmatpush.msra.mxu0 0.0
        %1091 = vmatpush.msra.mxu0 0.0
        %1092 = vmatpush.msra.mxu0 0.0
        %1093 = vmatpush.msra.mxu0 0.0
        %1094 = vmatpush.msra.mxu0 0.0
        %1095 = vmatpush.msra.mxu0 0.0
        %1096 = vmatpush.msra.mxu0 0.0
        %1097 = vmatpush.msra.mxu0 0.0
        %1098 = vmatpush.msra.mxu0 0.0
        %1099 = vmatpush.msra.mxu0 0.0
        %1100 = vmatpush.msra.mxu0 0.0
        %1101 = vmatpush.msra.mxu0 %v1082
        %1102 = vmatmul.f32.gmra.mxu0 %v1084
        %v1103 = vpop.f32.mrf.mxu0
        %v1104 = vadd.f32 0.0, %v1103
        %1105 = vdwg.mxu0
        %v1106 = vld [vmem:[#allocation6] sm:$0xff]
        %v1107 = vadd.f32 %v1106, %v1104
        %1108 = vst.msk [vmem:[#allocation6] sm:$0xff] %vm753, %v1107
        %v1109 = vld [vmem:[#allocation5] sm:$0xff]
        %v1110 = vld [vmem:[#allocation3] sm:$0xff]
        %1112 = vrot.lane.b32.xlu0 %v1109, 104
        %v1113 = vpop.permute.xlu0 %1112
        %1115 = vrot.lane.b32.xlu0 %v1110, 104
        %v1116 = vpop.permute.xlu0 %1115
        %v1117 = vsel %vm780, %v1113, 0
        %v1119 = vsel %vm780, %v1116, 0
        %1121 = vmatpush.xpose.msra.mxu0 0.0
        %1122 = vmatpush.xpose.msra.mxu0 0.0
        %1123 = vmatpush.xpose.msra.mxu0 0.0
        %1124 = vmatpush.xpose.msra.mxu0 0.0
        %1125 = vmatpush.xpose.msra.mxu0 0.0
        %1126 = vmatpush.xpose.msra.mxu0 0.0
        %1127 = vmatpush.xpose.msra.mxu0 0.0
        %1128 = vmatpush.xpose.msra.mxu0 0.0
        %1129 = vmatpush.xpose.msra.mxu0 0.0
        %1130 = vmatpush.xpose.msra.mxu0 0.0
        %1131 = vmatpush.xpose.msra.mxu0 0.0
        %1132 = vmatpush.xpose.msra.mxu0 0.0
        %1133 = vmatpush.xpose.msra.mxu0 0.0
        %1134 = vmatpush.xpose.msra.mxu0 0.0
        %1135 = vmatpush.xpose.msra.mxu0 0.0
        %1136 = vmatpush.xpose.msra.mxu0 %v1119
        %1137 = vmatmul.f32.gmra.mxu0 %v1117
        %v1138 = vpop.f32.mrf.mxu0
        %v1139 = vadd.f32 0.0, %v1138
        %1140 = vdwg.mxu0
        %v1141 = vsel %vm780, %v1139, -inf
        %1142 = vmax.xlane.f32.xlu0 %v1141
        %v1143 = vpop.xlane.xlu0 %1142
        %v1144 = vsub.f32 %v1139, %v1143
        %v1145 = vmul.f32 %v1144, 1.442695
        %v1146 = vpow.pop %v1145
        %v1147 = vsel %vm780, %v1146, 0.0
        %1148 = vadd.xlane.f32.xlu0 %v1147
        %v1149 = vpop.xlane.xlu0 %1148
        %v1150 = vrcp.pop %v1149
        %v1151 = vmul.f32 %v1149, %v1150
        %v1152 = vsub.f32 1.0, %v1151
        %v1153 = vmul.f32 %v1150, %v1152
        %v1154 = vadd.f32 %v1150, %v1153
        %vm1155 = vweird.f32 %v1149
        %vm1156 = vweird.f32 %v1150
        %vm1157 = vmor %vm1155, %vm1156
        %v1158 = vsel %vm1157, %v1150, %v1154
        %v1159 = vand.u32 2147483647, %v1149
        %vm1160 = vcmp.eq.f32.partialorder %v1159, 8.507059e+37
        %v1161 = vand.u32 %v1149, 2147483648
        %v1162 = vor.u32 1.1754944e-38, %v1161
        %v1163 = vsel %vm1160, %v1162, %v1158
        %v1164 = vmul.f32 %v1146, %v1163
        %v1165 = vld [vmem:[%s634] sm:$0xff]
        %v1166 = vadd.f32 %v1165, %v1164
        %v1167 = vmul.f32 %v1166, 0.25
        %1168 = vst.msk [vmem:[%s634] sm:$0xff] %vm780, %v1167
        %v1169 = vld [vmem:[#allocation4] sm:$0xff]
        %1171 = vrot.lane.b32.xlu0 %v1169, 104
        %v1172 = vpop.permute.xlu0 %1171
        %v1175 = vsel %vm780, %v1164, 0
        %1177 = vmatpush.msra.mxu0 0.0
        %1178 = vmatpush.msra.mxu0 0.0
        %1179 = vmatpush.msra.mxu0 0.0
        %1180 = vmatpush.msra.mxu0 0.0
        %1181 = vmatpush.msra.mxu0 0.0
        %1182 = vmatpush.msra.mxu0 0.0
        %1183 = vmatpush.msra.mxu0 0.0
        %1184 = vmatpush.msra.mxu0 0.0
        %1185 = vmatpush.msra.mxu0 0.0
        %1186 = vmatpush.msra.mxu0 0.0
        %1187 = vmatpush.msra.mxu0 0.0
        %1188 = vmatpush.msra.mxu0 0.0
        %1189 = vmatpush.msra.mxu0 0.0
        %1190 = vmatpush.msra.mxu0 0.0
        %1191 = vmatpush.msra.mxu0 0.0
        %1192 = vmatpush.msra.mxu0 %v1172
        %1193 = vmatmul.f32.gmra.mxu0 %v1175
        %v1194 = vpop.f32.mrf.mxu0
        %v1195 = vadd.f32 0.0, %v1194
        %1196 = vdwg.mxu0
        %v1197 = vld [vmem:[%s9 + $0x18] sm:$0xff]
        %v1199 = vsel %vm780, %v1195, 0
        %1201 = vmatpush.msra.mxu0 0.0
        %1202 = vmatpush.msra.mxu0 0.0
        %1203 = vmatpush.msra.mxu0 0.0
        %1204 = vmatpush.msra.mxu0 0.0
        %1205 = vmatpush.msra.mxu0 0.0
        %1206 = vmatpush.msra.mxu0 0.0
        %1207 = vmatpush.msra.mxu0 0.0
        %1208 = vmatpush.msra.mxu0 0.0
        %1209 = vmatpush.msra.mxu0 0.0
        %1210 = vmatpush.msra.mxu0 0.0
        %1211 = vmatpush.msra.mxu0 0.0
        %1212 = vmatpush.msra.mxu0 0.0
        %1213 = vmatpush.msra.mxu0 0.0
        %1214 = vmatpush.msra.mxu0 0.0
        %1215 = vmatpush.msra.mxu0 0.0
        %1216 = vmatpush.msra.mxu0 %v1197
        %1217 = vmatmul.f32.gmra.mxu0 %v1199
        %v1218 = vpop.f32.mrf.mxu0
        %v1219 = vadd.f32 0.0, %v1218
        %1220 = vdwg.mxu0
        %v1221 = vld [vmem:[#allocation6] sm:$0xff]
        %v1222 = vadd.f32 %v1221, %v1219
        %1223 = vst.msk [vmem:[#allocation6] sm:$0xff] %vm753, %v1222
        %s1224 = scalar_lea.vmem %s571, %s742 [#allocation7]
        %v1225 = vld [vmem:[%s1224] sm:$0xff]
        %v1226 = vld [vmem:[#allocation6] sm:$0xff]
        %v1227 = vadd.f32 %v1225, %v1226
        %v1228 = vld [vmem:[%s10] sm:$0x1]
        %v1230 = vperm.slane %v1228, 0
        %v1232 = vadd.f32 %v1227, %v1230
        %v1233 = vsel %vm753, %v1232, 0.0
        %1234 = vadd.xlane.f32.xlu0 %v1233
        %v1235 = vpop.xlane.xlu0 %1234
        %v1236 = vrcp.pop 32.0
        %v1237 = vmul.f32 32.0, %v1236
        %v1238 = vsub.f32 1.0, %v1237
        %v1239 = vmul.f32 %v1236, %v1238
        %v1240 = vadd.f32 %v1236, %v1239
        %vm1241 = vweird.f32 %v1236
        %v1242 = vsel %vm1241, %v1236, %v1240
        %v1243 = vmul.f32 %v1235, %v1242
        %v1244 = vsub.f32 %v1232, %v1243
        %v1245 = vmul.f32 %v1244, %v1244
        %v1246 = vsel %vm753, %v1245, 0.0
        %1247 = vadd.xlane.f32.xlu0 %v1246
        %v1248 = vpop.xlane.xlu0 %1247
        %v1249 = vmul.f32 %v1248, %v1242
        %v1250 = vadd.f32 %v1249, 1e-05
        %v1251 = vrsqrt.pop %v1250
        %v1252 = vmul.f32 %v1251, %v1250
        %v1253 = vmul.f32 %v1252, %v1251
        %v1254 = vmul.f32 0.5, %v1253
        %v1255 = vsub.f32 1.5, %v1254
        %v1256 = vmul.f32 %v1251, %v1255
        %vm1257 = vweird.f32 %v1250
        %vm1258 = vweird.f32 %v1251
        %vm1259 = vmor %vm1257, %vm1258
        %v1260 = vsel %vm1259, %v1251, %v1256
        %v1261 = vmul.f32 %v1244, %v1260
        %v1262 = vld [vmem:[%s11] sm:$0x1]
        %v1264 = vperm.slane %v1262, 0
        %v1266 = vmul.f32 %v1261, %v1264
        %v1267 = vld [vmem:[%s12] sm:$0x1]
        %v1269 = vperm.slane %v1267, 0
        %v1271 = vadd.f32 %v1266, %v1269
        %v1272 = vld [vmem:[%s13] sm:$0xff]
        %v1273 = vld [vmem:[%s13 + $0x8] sm:$0xff]
        %v1274 = vld [vmem:[%s13 + $0x10] sm:$0xff]
        %v1275 = vld [vmem:[%s13 + $0x18] sm:$0xff]
        %v1276 = vld [vmem:[%s14] sm:$0x1]
        %v1278 = vperm.slane %v1276, 0
        %v1281 = vsel %vm753, %v1271, 0
        %1283 = vmatpush.msra.mxu0 0.0
        %1284 = vmatpush.msra.mxu0 0.0
        %1285 = vmatpush.msra.mxu0 0.0
        %1286 = vmatpush.msra.mxu0 0.0
        %1287 = vmatpush.msra.mxu0 0.0
        %1288 = vmatpush.msra.mxu0 0.0
        %1289 = vmatpush.msra.mxu0 0.0
        %1290 = vmatpush.msra.mxu0 0.0
        %1291 = vmatpush.msra.mxu0 0.0
        %1292 = vmatpush.msra.mxu0 0.0
        %1293 = vmatpush.msra.mxu0 0.0
        %1294 = vmatpush.msra.mxu0 0.0
        %1295 = vmatpush.msra.mxu0 %v1275
        %1296 = vmatpush.msra.mxu0 %v1274
        %1297 = vmatpush.msra.mxu0 %v1273
        %1298 = vmatpush.msra.mxu0 %v1272
        %1299 = vmatmul.f32.gmra.mxu0 %v1281
        %v1300 = vpop.f32.mrf.mxu0
        %v1301 = vadd.f32 %v1278, %v1300
        %1302 = vdwg.mxu0
        %v1303 = vmul.f32 %v1301, 1.702
        %v1304 = vxor.u32 %v1303, 2147483648
        %v1305 = vmul.f32 %v1304, 1.442695
        %v1306 = vpow.pop %v1305
        %v1307 = vadd.f32 %v1306, 1.0
        %v1308 = vrcp.pop %v1307
        %v1309 = vmul.f32 %v1307, %v1308
        %v1310 = vsub.f32 1.0, %v1309
        %v1311 = vmul.f32 %v1308, %v1310
        %v1312 = vadd.f32 %v1308, %v1311
        %vm1313 = vweird.f32 %v1307
        %vm1314 = vweird.f32 %v1308
        %vm1315 = vmor %vm1313, %vm1314
        %v1316 = vsel %vm1315, %v1308, %v1312
        %v1317 = vand.u32 2147483647, %v1307
        %vm1318 = vcmp.eq.f32.partialorder %v1317, 8.507059e+37
        %v1319 = vand.u32 %v1307, 2147483648
        %v1320 = vor.u32 1.1754944e-38, %v1319
        %v1321 = vsel %vm1318, %v1320, %v1316
        %v1322 = vmul.f32 1.0, %v1321
        %v1323 = vmul.f32 %v1301, %v1322
        %v1324 = vld [vmem:[%s15] sm:$0xff]
        %v1325 = vld [vmem:[%s15 + $0x8] sm:$0xff]
        %v1326 = vld [vmem:[%s15 + $0x10] sm:$0xff]
        %v1327 = vld [vmem:[%s15 + $0x18] sm:$0xff]
        %v1328 = vld [vmem:[%s15 + $0x20] sm:$0xff]
        %v1329 = vld [vmem:[%s15 + $0x28] sm:$0xff]
        %v1330 = vld [vmem:[%s15 + $0x30] sm:$0xff]
        %v1331 = vld [vmem:[%s15 + $0x38] sm:$0xff]
        %v1332 = vld [vmem:[%s15 + $0x40] sm:$0xff]
        %v1333 = vld [vmem:[%s15 + $0x48] sm:$0xff]
        %v1334 = vld [vmem:[%s15 + $0x50] sm:$0xff]
        %v1335 = vld [vmem:[%s15 + $0x58] sm:$0xff]
        %v1336 = vld [vmem:[%s15 + $0x60] sm:$0xff]
        %v1337 = vld [vmem:[%s15 + $0x68] sm:$0xff]
        %v1338 = vld [vmem:[%s15 + $0x70] sm:$0xff]
        %v1339 = vld [vmem:[%s15 + $0x78] sm:$0xff]
        %v1340 = vld [vmem:[%s16] sm:$0x1]
        %v1342 = vperm.slane %v1340, 0
        %1344 = vmatpush.msra.mxu0 %v1339
        %1345 = vmatpush.msra.mxu0 %v1338
        %1346 = vmatpush.msra.mxu0 %v1337
        %1347 = vmatpush.msra.mxu0 %v1336
        %1348 = vmatpush.msra.mxu0 %v1335
        %1349 = vmatpush.msra.mxu0 %v1334
        %1350 = vmatpush.msra.mxu0 %v1333
        %1351 = vmatpush.msra.mxu0 %v1332
        %1352 = vmatpush.msra.mxu0 %v1331
        %1353 = vmatpush.msra.mxu0 %v1330
        %1354 = vmatpush.msra.mxu0 %v1329
        %1355 = vmatpush.msra.mxu0 %v1328
        %1356 = vmatpush.msra.mxu0 %v1327
        %1357 = vmatpush.msra.mxu0 %v1326
        %1358 = vmatpush.msra.mxu0 %v1325
        %1359 = vmatpush.msra.mxu0 %v1324
        %1360 = vmatmul.f32.gmra.mxu0 %v1323
        %v1361 = vpop.f32.mrf.mxu0
        %v1362 = vadd.f32 %v1342, %v1361
        %1363 = vdwg.mxu0
        %v1364 = vadd.f32 %v1232, %v1362
        %1365 = vst.msk [vmem:[%s627] sm:$0xff] %vm753, %v1364
        %s1366 = sand.u32 %s424, 1
        %s1367 = scalar_lea.sflag [#allocation9], %s1366
        %s1368 = sand.u32 %s424, 1
        %s1369 = smul.addr %s1368, 8
        %s1370 = scalar_lea.vmem [#allocation12], %s1369
        %s1371 = sand.u32 %s452, 1
        %s1372 = scalar_lea.sflag [#allocation14], %s1371
        %s1373 = sand.u32 %s452, 1
        %s1374 = smul.addr %s1373, 8
        %s1375 = scalar_lea.vmem [#allocation13], %s1374
        // Predicated region
        $region101: #{tpu_custom_call.1} parent=87 // pred_check
          %p1376 = pneg %p434
        $region102: #{tpu_custom_call.1} parent=87 // pred_check_branch
          %1378 = sbr.rel (%p1376) target = $region104
        $region103: #{tpu_custom_call.1} parent=87 // pred_region
          %1380 = vsyncadd %s1367, 0
          %s1381 = sadd.s32 %s45, %s44
          %s1382 = smul.addr %s1381, 8
          %s1383 = scalar_lea.hbm %s17, %s1382
          %s1385 = sshll.u32 %s1370, 4
          %s1386 = int_to_ptr.vmem [resolvable:$true] %s1385
          %s1387 = sshll.u32 %s1383, 4
          %s1388 = int_to_ptr.hbm [resolvable:$true] %s1387
          %1390 = dma.vmem_to_hbm [thread:$0]  %s1386, 128, %s1388, %s1367
        $region104: #{tpu_custom_call.1} parent=87 // pred_fallthru
          _
        // Predicated region
        $region105: #{tpu_custom_call.1} parent=87 // pred_check
          %p1391 = pneg %p462
        $region106: #{tpu_custom_call.1} parent=87 // pred_check_branch
          %1393 = sbr.rel (%p1391) target = $region108
        $region107: #{tpu_custom_call.1} parent=87 // pred_region
          %1395 = vsyncadd %s1372, 0
          %s1396 = sadd.s32 %s45, %s44
          %s1397 = smul.addr %s1396, 8
          %s1398 = scalar_lea.hbm %s18, %s1397
          %s1400 = sshll.u32 %s1375, 4
          %s1401 = int_to_ptr.vmem [resolvable:$true] %s1400
          %s1402 = sshll.u32 %s1398, 4
          %s1403 = int_to_ptr.hbm [resolvable:$true] %s1402
          %1405 = dma.vmem_to_hbm [thread:$0]  %s1401, 128, %s1403, %s1372
        $region108: #{tpu_custom_call.1} parent=87 // pred_fallthru
          _
      $region88: #{tpu_custom_call.1} parent=5 // pred_fallthru
        _
      %p1406 = scmp.le.s32.totalorder 2, %s35
      // Predicated region
      $region109: #{tpu_custom_call.1} parent=5 // pred_check
        %p1407 = pneg %p1406
      $region110: #{tpu_custom_call.1} parent=5 // pred_check_branch
        %1409 = sbr.rel (%p1407) target = $region112
      $region111: #{tpu_custom_call.1} parent=5 // pred_region
        %s1410 = ssub.s32 %s35, 2
        // Predicated region
        $region113: #{tpu_custom_call.1} parent=111 // pred_check
          %p1411 = pneg %p440
        $region114: #{tpu_custom_call.1} parent=111 // pred_check_branch
          %1413 = sbr.rel (%p1411) target = $region116
        $region115: #{tpu_custom_call.1} parent=111 // pred_region
          %s1414 = sand.u32 %s425, 1
          %s1415 = scalar_lea.sflag [#allocation9], %s1414
          %s1416 = sand.u32 %s425, 1
          %s1417 = smul.addr %s1416, 8
          %s1418 = scalar_lea.vmem [#allocation12], %s1417
          %1420 = dma.done %s1415, 128
        $region116: #{tpu_custom_call.1} parent=111 // pred_fallthru
          _
        // Predicated region
        $region117: #{tpu_custom_call.1} parent=111 // pred_check
          %p1421 = pneg %p468
        $region118: #{tpu_custom_call.1} parent=111 // pred_check_branch
          %1423 = sbr.rel (%p1421) target = $region120
        $region119: #{tpu_custom_call.1} parent=111 // pred_region
          %s1424 = sand.u32 %s453, 1
          %s1425 = scalar_lea.sflag [#allocation14], %s1424
          %s1426 = sand.u32 %s453, 1
          %s1427 = smul.addr %s1426, 8
          %s1428 = scalar_lea.vmem [#allocation13], %s1427
          %1430 = dma.done %s1425, 128
        $region120: #{tpu_custom_call.1} parent=111 // pred_fallthru
          _
      $region112: #{tpu_custom_call.1} parent=5 // pred_fallthru
        _
    $region6: #{tpu_custom_call.1} parent=1 // loop_footer
      %s39 = sadd.s32 1, %s35
    $region7: #{tpu_custom_call.1} parent=1 // loop_footer_branch
      %34 = sbr.rel target = $region3
    $region8: #{tpu_custom_call.1} parent=1 // loop_exit
      _
    %1431 = vsyncpa [#allocation8], 1
    %s1432 = scalar_lea.sflag [#allocation8], 1
    %1433 = vsyncpa %s1432, 1
    %1434 = vsyncpa [#allocation11], 1
    %1435 = vsyncpa [#allocation9], 1
    %s1436 = scalar_lea.sflag [#allocation9], 1
    %1437 = vsyncpa %s1436, 1
    %1438 = vsyncpa [#allocation14], 1
    %s1439 = scalar_lea.sflag [#allocation14], 1
    %1440 = vsyncpa %s1439, 1

</llo_original>
